<compile_context>
chip_gen: v6e
topology: v6e:2x2x1
jax: 0.10.0
libtpu: 0.0.40
codegen_flags: <defaults>
</compile_context>

<pallas_src>
import jax
import jax.numpy as jnp
from jax.experimental import pallas as pl
from jax.experimental.pallas import tpu as pltpu


def _round_up(x, m):
    return (x + m - 1) // m * m


def _vmem_capacity_bytes():
    try:
        return int(pltpu.get_tpu_info().vmem_capacity_bytes)
    except Exception:
        return 64 * 1024 * 1024  # conservative fallback (v7x per-TC VMEM)


def _per_batch_block_bytes(tS, Tb, Dp, a_isize):
    """Estimated VMEM bytes per batch element of the block, per grid step."""
    b = 2 * Tb * Dp * 4            # decoder-hidden block (f32, double-buffered)
    b += 2 * tS * Dp * 4           # memory-bank tile (f32, double-buffered)
    b += 2 * tS * 4                # mask-bias tile
    b += 2 * Tb * Dp * 4           # attn_h output block
    b += 2 * Tb * tS * a_isize     # align output block
    b += 2 * Tb * 128 * 4          # lse output block (lane padded)
    b += Tb * (Dp + 2 * 128) * 4   # ctx / running-max / denom VMEM scratch
    b += tS * Dp * 2               # bf16 cast of the bank tile
    b += 2 * Tb * tS * 4           # scores + p f32 temporaries
    b += Tb * Dp * 12              # q_bf / ctx_bf / linear_out temporaries
    return b


def _choose_tiles(B, Tb, S, Dp, a_isize, vmem_limit):
    """Pick (S tile, batch block) against the granted VMEM budget."""
    reserve = 4 * 1024 * 1024                  # Mosaic internal scratch headroom
    w_fixed = 2 * (2 * Dp * Dp * 2 + Dp * 4)   # wc/wh/bias blocks (dbl-buffered)
    budget = max(vmem_limit - reserve - w_fixed, 1 * 1024 * 1024)

    s128 = _round_up(S, 128)
    cands = []
    if s128 <= 2048:
        cands.append(s128)                     # single S pass when it fits
    for c in (1024, 512, 256, 128):
        if c < s128:
            cands.append(c)

    # Keep >= 2 "parallel" batch steps so both v7x TensorCores get work.
    bB_cap = 1 if B <= 1 else max(1, -(-B // 2))
    bB_cap = min(bB_cap, 32 if Tb == 1 else 64)

    first_fit = None
    for tS in cands:
        unit = _per_batch_block_bytes(tS, Tb, Dp, a_isize)
        bB = min(bB_cap, budget // unit)
        if bB >= 1 and first_fit is None:
            first_fit = (tS, int(bB))
        if bB >= min(4, bB_cap):               # decent batch block -> take it
            return tS, int(bB)
    if first_fit is not None:
        return first_fit
    return 128, 1


def _make_kernel(*, has_bias, n_s, Tb):
    """Kernel factory (trace-time specialization on bias / #S-tiles / T rows)."""

    def kernel(*refs):
        if has_bias:
            (q_ref, m_ref, bias_ref, wc_ref, wh_ref, b_ref,
             attn_ref, align_ref, lse_ref, m_sc, l_sc, ctx_sc) = refs
        else:
            (q_ref, m_ref, wc_ref, wh_ref, b_ref,
             attn_ref, align_ref, lse_ref, m_sc, l_sc, ctx_sc) = refs
            bias_ref = None

        s_idx = pl.program_id(1)

        @pl.when(s_idx == 0)
        def _init():
            m_sc[...] = jnp.full(m_sc.shape, -jnp.inf, dtype=m_sc.dtype)
            l_sc[...] = jnp.zeros(l_sc.shape, dtype=l_sc.dtype)
            ctx_sc[...] = jnp.zeros(ctx_sc.shape, dtype=ctx_sc.dtype)

        q = q_ref[...]                                  # (bB, Tb, Dp) f32
        q_bf = q.astype(jnp.bfloat16)                   # cast in-kernel (MXU)
        m_bf = m_ref[...].astype(jnp.bfloat16)          # (bB, tS, Dp)

        # Dot-product score over the shared D axis; f32 accumulation.
        scores = jnp.einsum('btd,bsd->bts', q_bf, m_bf,
                            preferred_element_type=jnp.float32)
        if has_bias:
            scores = scores + bias_ref[...]             # (bB, 1, tS) broadcast

        if n_s > 1:
            # Raw (masked) scores; normalized in the fused XLA epilogue.
            align_ref[...] = scores.astype(align_ref.dtype)

        # Online softmax update (f32 elementwise / EUP math).
        m_prev = m_sc[...]
        m_new = jnp.maximum(m_prev, jnp.max(scores, axis=-1, keepdims=True))
        alpha = jnp.exp(m_prev - m_new)
        p = jnp.exp(scores - m_new)                     # (bB, Tb, tS)
        l_sc[...] = alpha * l_sc[...] + jnp.sum(p, axis=-1, keepdims=True)
        ctx_sc[...] = alpha * ctx_sc[...] + jnp.einsum(
            'bts,bsd->btd', p.astype(jnp.bfloat16), m_bf,
            preferred_element_type=jnp.float32)
        m_sc[...] = m_new

        @pl.when(s_idx == n_s - 1)
        def _finalize():
            l = l_sc[...]
            inv_l = 1.0 / l                             # exact normalization
            lse_ref[...] = m_sc[...] + jnp.log(l)
            if n_s == 1:
                # single S pass: write normalized align directly
                align_ref[...] = (p * inv_l).astype(align_ref.dtype)

            ctx = ctx_sc[...] * inv_l                   # (bB, Tb, Dp) f32
            bB, _, Dp = ctx.shape
            wc = wc_ref[...]
            wh = wh_ref[...]
            bv = b_ref[...]
            if Tb % 8 == 0:
                # Pack (bB*Tb) rows into the MXU M dimension (f32 reshape is a
                # layout no-op because Tb is a multiple of 8).
                c2 = ctx.reshape(bB * Tb, Dp).astype(jnp.bfloat16)
                h2 = q.reshape(bB * Tb, Dp).astype(jnp.bfloat16)
                attn = (jnp.dot(c2, wc, preferred_element_type=jnp.float32)
                        + jnp.dot(h2, wh, preferred_element_type=jnp.float32)
                        + bv)
                attn_ref[...] = jnp.tanh(attn).reshape(
                    bB, Tb, Dp).astype(attn_ref.dtype)
            else:
                # Tb == 1 (decode): per-batch-row matmuls, no reshape relayout.
                for b in range(bB):
                    c_b = ctx[b].astype(jnp.bfloat16)   # (1, Dp)
                    h_b = q_bf[b]                       # (1, Dp)
                    o_b = (jnp.dot(c_b, wc, preferred_element_type=jnp.float32)
                           + jnp.dot(h_b, wh, preferred_element_type=jnp.float32)
                           + bv)
                    attn_ref[b] = jnp.tanh(o_b).astype(attn_ref.dtype)

    return kernel


def attention_forward(decoder_hidden, memory_bank, weight, bias,
                      memory_mask=None, *, block_b=None, block_s=None,
                      align_dtype=jnp.float32):
    """Pallas port of AttentionBase.forward (dot-product score).

    decoder_hidden: (B, T, D) or (B, D)   float32
    memory_bank   : (B, S, D)             float32
    weight        : (D, 2*D)  (PyTorch nn.Linear weight, out x in)
    bias          : (D,)
    memory_mask   : optional (B, S), 0 = masked out
    Returns (attn_h, align_vectors) with PyTorch's axis conventions:
      multi-step -> (T, B, D), (T, B, S);  one-step -> (B, D), (B, S).
    """
    one_step = decoder_hidden.ndim == 2
    if one_step:
        decoder_hidden = decoder_hidden[:, None, :]

    B, S, D = memory_bank.shape
    T = decoder_hidden.shape[1]

    f32 = jnp.float32
    Dp = _round_up(D, 128)
    Tb = 1 if T == 1 else _round_up(T, 8)   # decode path: no T padding at all
    a_isize = jnp.dtype(align_dtype).itemsize

    vmem_cap = _vmem_capacity_bytes()
    vmem_limit = int(min(vmem_cap * 3 // 4, 127 * 1024 * 1024))

    tS, bB = _choose_tiles(B, Tb, S, Dp, a_isize, vmem_limit)
    if block_s is not None:
        assert block_s % 128 == 0, "block_s must be a multiple of 128"
        tS = int(block_s)
    if block_b is not None:
        bB = max(1, int(block_b))

    Sp = _round_up(S, tS)
    Bp = _round_up(B, bB)
    n_s = Sp // tS
    n_b = Bp // bB
    has_bias = (memory_mask is not None) or (Sp != S)

    # Inputs stay f32 (cast to bf16 in-kernel); pads fold away when aligned.
    q_p = jnp.pad(decoder_hidden.astype(f32),
                  ((0, Bp - B), (0, Tb - T), (0, Dp - D)))
    m_p = jnp.pad(memory_bank.astype(f32),
                  ((0, Bp - B), (0, Sp - S), (0, Dp - D)))

    # nn.Linear weight (out=D, in=2D): first D input cols act on context, last
    # D on decoder_hidden.  Transpose for x @ W layout, pad, cast to bf16.
    w = weight.astype(f32)
    wc = jnp.pad(w[:, :D].T, ((0, Dp - D), (0, Dp - D))).astype(jnp.bfloat16)
    wh = jnp.pad(w[:, D:].T, ((0, Dp - D), (0, Dp - D))).astype(jnp.bfloat16)
    b2 = jnp.pad(bias.astype(f32), (0, Dp - D)).reshape(1, Dp)

    inputs = [q_p, m_p]
    in_specs = [
        pl.BlockSpec((bB, Tb, Dp), lambda b, s: (b, 0, 0)),   # decoder_hidden
        pl.BlockSpec((bB, tS, Dp), lambda b, s: (b, s, 0)),   # memory_bank tile
    ]
    if has_bias:
        # Additive mask bias: 0 keep / -1e30 drop (finite so a fully-masked S
        # tile cannot NaN-poison the online softmax).
        col_valid = jnp.arange(Sp) < S
        if memory_mask is None:
            valid = jnp.broadcast_to(col_valid, (Bp, Sp))
        else:
            mm = jnp.pad(memory_mask != 0, ((0, Bp - B), (0, Sp - S)),
                         constant_values=True)
            valid = mm & col_valid[None, :]
        mask_bias = jnp.where(valid, 0.0, -1e30).astype(f32)[:, None, :]
        inputs.append(mask_bias)
        in_specs.append(pl.BlockSpec((bB, 1, tS), lambda b, s: (b, 0, s)))
    inputs += [wc, wh, b2]
    in_specs += [
        pl.BlockSpec((Dp, Dp), lambda b, s: (0, 0)),          # Wc (context)
        pl.BlockSpec((Dp, Dp), lambda b, s: (0, 0)),          # Wh (hidden)
        pl.BlockSpec((1, Dp), lambda b, s: (0, 0)),           # bias
    ]

    out_shapes = (
        jax.ShapeDtypeStruct((Bp, Tb, Dp), f32),              # attn_h
        jax.ShapeDtypeStruct((Bp, Tb, Sp), align_dtype),      # align (raw/norm)
        jax.ShapeDtypeStruct((Bp, Tb, 1), f32),               # lse
    )
    out_specs = [
        pl.BlockSpec((bB, Tb, Dp), lambda b, s: (b, 0, 0)),
        pl.BlockSpec((bB, Tb, tS), lambda b, s: (b, 0, s)),
        pl.BlockSpec((bB, Tb, 1), lambda b, s: (b, 0, 0)),
    ]
    scratch = [
        pltpu.VMEM((bB, Tb, 1), f32),     # running max
        pltpu.VMEM((bB, Tb, 1), f32),     # running denominator
        pltpu.VMEM((bB, Tb, Dp), f32),    # context accumulator
    ]

    kernel = _make_kernel(has_bias=has_bias, n_s=n_s, Tb=Tb)

    attn_p, align_raw, lse = pl.pallas_call(
        kernel,
        out_shape=out_shapes,
        grid_spec=pltpu.PrefetchScalarGridSpec(
            num_scalar_prefetch=0,
            grid=(n_b, n_s),
            in_specs=in_specs,
            out_specs=out_specs,
            scratch_shapes=scratch),
        compiler_params=pltpu.CompilerParams(
            dimension_semantics=("parallel", "arbitrary"),
            vmem_limit_bytes=vmem_limit),
    )(*inputs)

    if n_s == 1:
        align_full = align_raw                       # already normalized
    else:
        # Fused by XLA with the slice/transpose below into a single pass.
        align_full = jnp.exp(align_raw.astype(f32) - lse).astype(align_dtype)

    attn_h = attn_p[:B, :T, :D]
    align_v = align_full[:B, :T, :S]
    if one_step:
        return attn_h[:, 0, :], align_v[:, 0, :]
    return jnp.transpose(attn_h, (1, 0, 2)), jnp.transpose(align_v, (1, 0, 2))


def _reference_forward(decoder_hidden, memory_bank, weight, bias,
                       memory_mask=None):
    """Pure-JAX f32 reference mirroring the PyTorch forward."""
    one_step = decoder_hidden.ndim == 2
    if one_step:
        decoder_hidden = decoder_hidden[:, None, :]
    B, S, D = memory_bank.shape
    T = decoder_hidden.shape[1]
    align = jnp.einsum("btd,bsd->bts", decoder_hidden, memory_bank)
    if memory_mask is not None:
        align = jnp.where(memory_mask[:, None, :] == 0, -jnp.inf, align)
    align_v = jax.nn.softmax(align, axis=-1)
    context = jnp.einsum("bts,bsd->btd", align_v, memory_bank)
    concat = jnp.concatenate([context, decoder_hidden], axis=-1)
    attn_h = jnp.tanh(concat.reshape(B * T, 2 * D) @ weight.T + bias)
    attn_h = attn_h.reshape(B, T, D)
    if one_step:
        return attn_h[:, 0], align_v[:, 0]
    return jnp.transpose(attn_h, (1, 0, 2)), jnp.transpose(align_v, (1, 0, 2))


def _make_inputs(key, B, T, S, D, with_mask):
    k1, k2, k3, k4, k5 = jax.random.split(key, 5)
    decoder_hidden = jax.random.normal(k1, (B, T, D), dtype=jnp.float32)
    memory_bank = jax.random.normal(k2, (B, S, D), dtype=jnp.float32)
    bound = 1.0 / jnp.sqrt(2.0 * D)
    weight = jax.random.uniform(k3, (D, 2 * D), minval=-bound, maxval=bound,
                                dtype=jnp.float32)
    bias = jax.random.uniform(k4, (D,), minval=-bound, maxval=bound,
                              dtype=jnp.float32)
    if with_mask:
        mask = (jax.random.uniform(k5, (B, S)) > 0.3).astype(jnp.int32)
        mask = mask.at[:, 0].set(1)   # keep >=1 valid source position per row
    else:
        mask = None
    return decoder_hidden, memory_bank, weight, bias, mask


def _check(name, out, ref, atol=6e-2, rtol=6e-2):
    assert out.shape == ref.shape, (name, out.shape, ref.shape)
    assert jnp.allclose(out, ref, atol=atol, rtol=rtol), name


if __name__ == "__main__":
    # bf16 MXU operands -> compare to the f32 reference with loosened tolerance.

    # 1) Multi-step with mask, non-aligned sizes (padding in B/T/S/D),
    #    packed linear_out, single S pass, 2 parallel batch steps.
    B, T, S, D = 3, 5, 20, 48
    dh, mb, w, b, mask = _make_inputs(jax.random.PRNGKey(0), B, T, S, D, True)
    ah, av = attention_forward(dh, mb, w, b, mask)
    ah = jax.block_until_ready(ah)
    rh, ra = _reference_forward(dh, mb, w, b, mask)
    assert ah.shape == (T, B, D) and av.shape == (T, B, S)
    _check("cfg1.attn", ah, rh)
    _check("cfg1.align", av, ra)

    # 2) One-step (2-D hidden), no mask, S needs lane padding (mask-bias path).
    B, S, D = 2, 8, 32
    dh, mb, w, b, _ = _make_inputs(jax.random.PRNGKey(1), B, 1, S, D, False)
    ah, av = attention_forward(dh[:, 0, :], mb, w, b, None)
    ah = jax.block_until_ready(ah)
    rh, ra = _reference_forward(dh[:, 0, :], mb, w, b, None)
    assert ah.shape == (B, D) and av.shape == (B, S)
    _check("cfg2.attn", ah, rh)
    _check("cfg2.align", av, ra)

    # 3) One-step, lane-aligned S and D (no-mask-bias kernel variant).
    B, S, D = 2, 128, 128
    dh, mb, w, b, _ = _make_inputs(jax.random.PRNGKey(2), B, 1, S, D, False)
    ah, av = attention_forward(dh[:, 0, :], mb, w, b, None)
    ah = jax.block_until_ready(ah)
    rh, ra = _reference_forward(dh[:, 0, :], mb, w, b, None)
    _check("cfg3.attn", ah, rh)
    _check("cfg3.align", av, ra)

    # 4) Multi-step with mask, forced S tiling (online softmax over 2 S tiles).
    B, T, S, D = 2, 4, 256, 64
    dh, mb, w, b, mask = _make_inputs(jax.random.PRNGKey(3), B, T, S, D, True)
    ah, av = attention_forward(dh, mb, w, b, mask, block_s=128)
    ah = jax.block_until_ready(ah)
    rh, ra = _reference_forward(dh, mb, w, b, mask)
    _check("cfg4.attn", ah, rh)
    _check("cfg4.align", av, ra)

    # 5) One-step decode path with forced S tiling, no mask, aligned S.
    B, S, D = 2, 256, 64
    dh, mb, w, b, _ = _make_inputs(jax.random.PRNGKey(4), B, 1, S, D, False)
    ah, av = attention_forward(dh[:, 0, :], mb, w, b, None, block_s=128)
    ah = jax.block_until_ready(ah)
    rh, ra = _reference_forward(dh[:, 0, :], mb, w, b, None)
    _check("cfg5.attn", ah, rh)
    _check("cfg5.align", av, ra)

    print("KERNEL_OK")
</pallas_src>

<mosaic_0001>
module attributes {stable_mosaic.version = 11 : i64} {
  func.func @kernel(%arg0: i32, %arg1: i32, %arg2: memref<2x8x128xf32, #tpu.memory_space<vmem>>, %arg3: memref<2x128x128xf32, #tpu.memory_space<vmem>>, %arg4: memref<2x1x128xf32, #tpu.memory_space<vmem>>, %arg5: memref<128x128xbf16, #tpu.memory_space<vmem>>, %arg6: memref<128x128xbf16, #tpu.memory_space<vmem>>, %arg7: memref<1x128xf32, #tpu.memory_space<vmem>>, %arg8: memref<2x8x128xf32, #tpu.memory_space<vmem>>, %arg9: memref<2x8x128xf32, #tpu.memory_space<vmem>>, %arg10: memref<2x8x1xf32, #tpu.memory_space<vmem>>, %arg11: memref<2x8x1xf32, #tpu.memory_space<vmem>>, %arg12: memref<2x8x1xf32, #tpu.memory_space<vmem>>, %arg13: memref<2x8x128xf32, #tpu.memory_space<vmem>>) attributes {dimension_semantics = [#tpu.dimension_semantics<parallel>, #tpu.dimension_semantics<arbitrary>], iteration_bounds = array<i64: 2, 1>, scalar_prefetch = 0 : i64, scratch_operands = 3 : i64, tpu.core_type = #tpu.core_type<tc>, window_params = [{transform_indices = @transform_0, window_bounds = array<i64: 2, 8, 128>}, {transform_indices = @transform_1, window_bounds = array<i64: 2, 128, 128>}, {transform_indices = @transform_2, window_bounds = array<i64: 2, 1, 128>}, {pipeline_mode = #tpu.pipeline_mode<synchronous>, transform_indices = @transform_3, window_bounds = array<i64: 128, 128>}, {pipeline_mode = #tpu.pipeline_mode<synchronous>, transform_indices = @transform_4, window_bounds = array<i64: 128, 128>}, {pipeline_mode = #tpu.pipeline_mode<synchronous>, transform_indices = @transform_5, window_bounds = array<i64: 1, 128>}, {transform_indices = @transform_6, window_bounds = array<i64: 2, 8, 128>}, {transform_indices = @transform_7, window_bounds = array<i64: 2, 8, 128>}, {transform_indices = @transform_8, window_bounds = array<i64: 2, 8, 1>}]} {
    %c0_i32 = arith.constant 0 : i32
    %0 = arith.cmpi eq, %arg1, %c0_i32 : i32
    %1 = arith.extui %0 : i1 to i32
    %c0_i32_0 = arith.constant 0 : i32
    %2 = arith.cmpi ne, %1, %c0_i32_0 : i32
    scf.if %2 {
      %cst_32 = arith.constant 0xFF800000 : f32
      %37 = vector.broadcast %cst_32 : f32 to vector<2x8x1xf32>
      %c0_33 = arith.constant 0 : index
      %c0_34 = arith.constant 0 : index
      %c0_35 = arith.constant 0 : index
      %38 = vector.load %arg11[%c0_33, %c0_34, %c0_35] : memref<2x8x1xf32, #tpu.memory_space<vmem>>, vector<2x8x1xf32>
      tpu.vector_store %arg11[%c0_33, %c0_34, %c0_35], %37 {strides = array<i32>} : memref<2x8x1xf32, #tpu.memory_space<vmem>>, vector<2x8x1xf32>,
      %cst_36 = arith.constant 0.000000e+00 : f32
      %39 = vector.broadcast %cst_36 : f32 to vector<2x8x1xf32>
      %c0_37 = arith.constant 0 : index
      %c0_38 = arith.constant 0 : index
      %c0_39 = arith.constant 0 : index
      %40 = vector.load %arg12[%c0_37, %c0_38, %c0_39] : memref<2x8x1xf32, #tpu.memory_space<vmem>>, vector<2x8x1xf32>
      tpu.vector_store %arg12[%c0_37, %c0_38, %c0_39], %39 {strides = array<i32>} : memref<2x8x1xf32, #tpu.memory_space<vmem>>, vector<2x8x1xf32>,
      %cst_40 = arith.constant 0.000000e+00 : f32
      %41 = vector.broadcast %cst_40 : f32 to vector<2x8x128xf32>
      %c0_41 = arith.constant 0 : index
      %c0_42 = arith.constant 0 : index
      %c0_43 = arith.constant 0 : index
      %42 = vector.load %arg13[%c0_41, %c0_42, %c0_43] : memref<2x8x128xf32, #tpu.memory_space<vmem>>, vector<2x8x128xf32>
      tpu.vector_store %arg13[%c0_41, %c0_42, %c0_43], %41 {strides = array<i32>} : memref<2x8x128xf32, #tpu.memory_space<vmem>>, vector<2x8x128xf32>,
    } else {
    }
    %c0 = arith.constant 0 : index
    %c0_1 = arith.constant 0 : index
    %c0_2 = arith.constant 0 : index
    %3 = vector.load %arg2[%c0, %c0_1, %c0_2] : memref<2x8x128xf32, #tpu.memory_space<vmem>>, vector<2x8x128xf32>
    %4 = arith.truncf %3 : vector<2x8x128xf32> to vector<2x8x128xbf16>
    %c0_3 = arith.constant 0 : index
    %c0_4 = arith.constant 0 : index
    %c0_5 = arith.constant 0 : index
    %5 = vector.load %arg3[%c0_3, %c0_4, %c0_5] : memref<2x128x128xf32, #tpu.memory_space<vmem>>, vector<2x128x128xf32>
    %6 = arith.truncf %5 : vector<2x128x128xf32> to vector<2x128x128xbf16>
    "tpu.trace_start"() <{level = 10 : i32, message = "btd,bsd->bts"}> : () -> ()
    %cst = arith.constant dense<0.000000e+00> : vector<2x8x128xf32>
    %7 = tpu.matmul %4, %6, %cst {dimension_numbers = #tpu.dot_dimension_numbers<[2], [2], [1], [1], [0, 0, 0, 1, 1, 1], [0], [0]>} : vector<2x8x128xbf16>, vector<2x128x128xbf16>, vector<2x8x128xf32> -> vector<2x8x128xf32>
    "tpu.trace_stop"() : () -> ()
    %c0_6 = arith.constant 0 : index
    %c0_7 = arith.constant 0 : index
    %c0_8 = arith.constant 0 : index
    %8 = vector.load %arg4[%c0_6, %c0_7, %c0_8] : memref<2x1x128xf32, #tpu.memory_space<vmem>>, vector<2x1x128xf32>
    %9 = vector.broadcast %8 : vector<2x1x128xf32> to vector<2x8x128xf32>
    %10 = arith.addf %7, %9 : vector<2x8x128xf32>
    %c0_9 = arith.constant 0 : index
    %c0_10 = arith.constant 0 : index
    %c0_11 = arith.constant 0 : index
    %11 = vector.load %arg11[%c0_9, %c0_10, %c0_11] : memref<2x8x1xf32, #tpu.memory_space<vmem>>, vector<2x8x1xf32>
    %cst_12 = arith.constant dense<0xFF800000> : vector<2x8xf32>
    %12 = vector.multi_reduction <maximumf>, %10, %cst_12 [2] : vector<2x8x128xf32> to vector<2x8xf32>
    %13 = vector.shape_cast %12 : vector<2x8xf32> to vector<2x8x1xf32>
    %14 = arith.maximumf %11, %13 : vector<2x8x1xf32>
    %15 = arith.subf %11, %14 : vector<2x8x1xf32>
    %16 = math.exp %15 : vector<2x8x1xf32>
    %17 = vector.broadcast %14 : vector<2x8x1xf32> to vector<2x8x128xf32>
    %18 = arith.subf %10, %17 : vector<2x8x128xf32>
    %19 = math.exp %18 : vector<2x8x128xf32>
    %c0_13 = arith.constant 0 : index
    %c0_14 = arith.constant 0 : index
    %c0_15 = arith.constant 0 : index
    %20 = vector.load %arg12[%c0_13, %c0_14, %c0_15] : memref<2x8x1xf32, #tpu.memory_space<vmem>>, vector<2x8x1xf32>
    %21 = arith.mulf %16, %20 : vector<2x8x1xf32>
    %cst_16 = arith.constant dense<0.000000e+00> : vector<2x8xf32>
    %22 = vector.multi_reduction <add>, %19, %cst_16 [2] : vector<2x8x128xf32> to vector<2x8xf32>
    %23 = vector.shape_cast %22 : vector<2x8xf32> to vector<2x8x1xf32>
    %24 = arith.addf %21, %23 : vector<2x8x1xf32>
    %c0_17 = arith.constant 0 : index
    %c0_18 = arith.constant 0 : index
    %c0_19 = arith.constant 0 : index
    %25 = vector.load %arg12[%c0_17, %c0_18, %c0_19] : memref<2x8x1xf32, #tpu.memory_space<vmem>>, vector<2x8x1xf32>
    tpu.vector_store %arg12[%c0_17, %c0_18, %c0_19], %24 {strides = array<i32>} : memref<2x8x1xf32, #tpu.memory_space<vmem>>, vector<2x8x1xf32>,
    %c0_20 = arith.constant 0 : index
    %c0_21 = arith.constant 0 : index
    %c0_22 = arith.constant 0 : index
    %26 = vector.load %arg13[%c0_20, %c0_21, %c0_22] : memref<2x8x128xf32, #tpu.memory_space<vmem>>, vector<2x8x128xf32>
    %27 = vector.broadcast %16 : vector<2x8x1xf32> to vector<2x8x128xf32>
    %28 = arith.mulf %27, %26 : vector<2x8x128xf32>
    %29 = arith.truncf %19 : vector<2x8x128xf32> to vector<2x8x128xbf16>
    "tpu.trace_start"() <{level = 10 : i32, message = "bts,bsd->btd"}> : () -> ()
    %cst_23 = arith.constant dense<0.000000e+00> : vector<2x8x128xf32>
    %30 = tpu.matmul %29, %6, %cst_23 {dimension_numbers = #tpu.dot_dimension_numbers<[2], [1], [1], [2], [0, 0, 0, 1, 1, 2], [0], [0]>} : vector<2x8x128xbf16>, vector<2x128x128xbf16>, vector<2x8x128xf32> -> vector<2x8x128xf32>
    "tpu.trace_stop"() : () -> ()
    %31 = arith.addf %28, %30 : vector<2x8x128xf32>
    %c0_24 = arith.constant 0 : index
    %c0_25 = arith.constant 0 : index
    %c0_26 = arith.constant 0 : index
    %32 = vector.load %arg13[%c0_24, %c0_25, %c0_26] : memref<2x8x128xf32, #tpu.memory_space<vmem>>, vector<2x8x128xf32>
    tpu.vector_store %arg13[%c0_24, %c0_25, %c0_26], %31 {strides = array<i32>} : memref<2x8x128xf32, #tpu.memory_space<vmem>>, vector<2x8x128xf32>,
    %c0_27 = arith.constant 0 : index
    %c0_28 = arith.constant 0 : index
    %c0_29 = arith.constant 0 : index
    %33 = vector.load %arg11[%c0_27, %c0_28, %c0_29] : memref<2x8x1xf32, #tpu.memory_space<vmem>>, vector<2x8x1xf32>
    tpu.vector_store %arg11[%c0_27, %c0_28, %c0_29], %14 {strides = array<i32>} : memref<2x8x1xf32, #tpu.memory_space<vmem>>, vector<2x8x1xf32>,
    %c0_i32_30 = arith.constant 0 : i32
    %34 = arith.cmpi eq, %arg1, %c0_i32_30 : i32
    %35 = arith.extui %34 : i1 to i32
    %c0_i32_31 = arith.constant 0 : i32
    %36 = arith.cmpi ne, %35, %c0_i32_31 : i32
    scf.if %36 {
      %c0_32 = arith.constant 0 : index
      %c0_33 = arith.constant 0 : index
      %c0_34 = arith.constant 0 : index
      %37 = vector.load %arg12[%c0_32, %c0_33, %c0_34] : memref<2x8x1xf32, #tpu.memory_space<vmem>>, vector<2x8x1xf32>
      %cst_35 = arith.constant 1.000000e+00 : f32
      %38 = vector.broadcast %cst_35 : f32 to vector<2x8x1xf32>
      %39 = arith.divf %38, %37 : vector<2x8x1xf32>
      %c0_36 = arith.constant 0 : index
      %c0_37 = arith.constant 0 : index
      %c0_38 = arith.constant 0 : index
      %40 = vector.load %arg11[%c0_36, %c0_37, %c0_38] : memref<2x8x1xf32, #tpu.memory_space<vmem>>, vector<2x8x1xf32>
      %41 = math.log %37 : vector<2x8x1xf32>
      %42 = arith.addf %40, %41 : vector<2x8x1xf32>
      %c0_39 = arith.constant 0 : index
      %c0_40 = arith.constant 0 : index
      %c0_41 = arith.constant 0 : index
      %43 = vector.load %arg10[%c0_39, %c0_40, %c0_41] : memref<2x8x1xf32, #tpu.memory_space<vmem>>, vector<2x8x1xf32>
      tpu.vector_store %arg10[%c0_39, %c0_40, %c0_41], %42 {strides = array<i32>} : memref<2x8x1xf32, #tpu.memory_space<vmem>>, vector<2x8x1xf32>,
      %44 = vector.broadcast %39 : vector<2x8x1xf32> to vector<2x8x128xf32>
      %45 = arith.mulf %19, %44 : vector<2x8x128xf32>
      %c0_42 = arith.constant 0 : index
      %c0_43 = arith.constant 0 : index
      %c0_44 = arith.constant 0 : index
      %46 = vector.load %arg9[%c0_42, %c0_43, %c0_44] : memref<2x8x128xf32, #tpu.memory_space<vmem>>, vector<2x8x128xf32>
      tpu.vector_store %arg9[%c0_42, %c0_43, %c0_44], %45 {strides = array<i32>} : memref<2x8x128xf32, #tpu.memory_space<vmem>>, vector<2x8x128xf32>,
      %c0_45 = arith.constant 0 : index
      %c0_46 = arith.constant 0 : index
      %c0_47 = arith.constant 0 : index
      %47 = vector.load %arg13[%c0_45, %c0_46, %c0_47] : memref<2x8x128xf32, #tpu.memory_space<vmem>>, vector<2x8x128xf32>
      %48 = vector.broadcast %39 : vector<2x8x1xf32> to vector<2x8x128xf32>
      %49 = arith.mulf %47, %48 : vector<2x8x128xf32>
      %c0_48 = arith.constant 0 : index
      %c0_49 = arith.constant 0 : index
      %50 = vector.load %arg5[%c0_48, %c0_49] : memref<128x128xbf16, #tpu.memory_space<vmem>>, vector<128x128xbf16>
      %c0_50 = arith.constant 0 : index
      %c0_51 = arith.constant 0 : index
      %51 = vector.load %arg6[%c0_50, %c0_51] : memref<128x128xbf16, #tpu.memory_space<vmem>>, vector<128x128xbf16>
      %c0_52 = arith.constant 0 : index
      %c0_53 = arith.constant 0 : index
      %52 = vector.load %arg7[%c0_52, %c0_53] : memref<1x128xf32, #tpu.memory_space<vmem>>, vector<1x128xf32>
      %53 = vector.shape_cast %49 : vector<2x8x128xf32> to vector<16x128xf32>
      %54 = arith.truncf %53 : vector<16x128xf32> to vector<16x128xbf16>
      %55 = vector.shape_cast %3 : vector<2x8x128xf32> to vector<16x128xf32>
      %56 = arith.truncf %55 : vector<16x128xf32> to vector<16x128xbf16>
      %cst_54 = arith.constant dense<0.000000e+00> : vector<16x128xf32>
      %57 = tpu.matmul %54, %50, %cst_54 {dimension_numbers = #tpu.dot_dimension_numbers<[1], [0], [0], [1], [0, 0, 1, 1], [], []>} : vector<16x128xbf16>, vector<128x128xbf16>, vector<16x128xf32> -> vector<16x128xf32>
      %cst_55 = arith.constant dense<0.000000e+00> : vector<16x128xf32>
      %58 = tpu.matmul %56, %51, %cst_55 {dimension_numbers = #tpu.dot_dimension_numbers<[1], [0], [0], [1], [0, 0, 1, 1], [], []>} : vector<16x128xbf16>, vector<128x128xbf16>, vector<16x128xf32> -> vector<16x128xf32>
      %59 = arith.addf %57, %58 : vector<16x128xf32>
      %60 = vector.broadcast %52 : vector<1x128xf32> to vector<16x128xf32>
      %61 = arith.addf %59, %60 : vector<16x128xf32>
      %62 = math.tanh %61 : vector<16x128xf32>
      %63 = vector.shape_cast %62 : vector<16x128xf32> to vector<2x8x128xf32>
      %c0_56 = arith.constant 0 : index
      %c0_57 = arith.constant 0 : index
      %c0_58 = arith.constant 0 : index
      %64 = vector.load %arg8[%c0_56, %c0_57, %c0_58] : memref<2x8x128xf32, #tpu.memory_space<vmem>>, vector<2x8x128xf32>
      tpu.vector_store %arg8[%c0_56, %c0_57, %c0_58], %63 {strides = array<i32>} : memref<2x8x128xf32, #tpu.memory_space<vmem>>, vector<2x8x128xf32>,
    } else {
    }
    return
  }
  func.func @transform_0(%arg0: i32, %arg1: i32) -> (i32, i32, i32) {
    %c0_i32 = arith.constant 0 : i32
    %c0_i32_0 = arith.constant 0 : i32
    %c0_i32_1 = arith.constant 0 : i32
    return %arg0, %c0_i32, %c0_i32_0 : i32, i32, i32
  }
  func.func @transform_1(%arg0: i32, %arg1: i32) -> (i32, i32, i32) {
    %c0_i32 = arith.constant 0 : i32
    %c0_i32_0 = arith.constant 0 : i32
    return %arg0, %arg1, %c0_i32 : i32, i32, i32
  }
  func.func @transform_2(%arg0: i32, %arg1: i32) -> (i32, i32, i32) {
    %c0_i32 = arith.constant 0 : i32
    %c0_i32_0 = arith.constant 0 : i32
    return %arg0, %c0_i32, %arg1 : i32, i32, i32
  }
  func.func @transform_3(%arg0: i32, %arg1: i32) -> (i32, i32) {
    %c0_i32 = arith.constant 0 : i32
    %c0_i32_0 = arith.constant 0 : i32
    %c0_i32_1 = arith.constant 0 : i32
    return %c0_i32, %c0_i32_0 : i32, i32
  }
  func.func @transform_4(%arg0: i32, %arg1: i32) -> (i32, i32) {
    %c0_i32 = arith.constant 0 : i32
    %c0_i32_0 = arith.constant 0 : i32
    %c0_i32_1 = arith.constant 0 : i32
    return %c0_i32, %c0_i32_0 : i32, i32
  }
  func.func @transform_5(%arg0: i32, %arg1: i32) -> (i32, i32) {
    %c0_i32 = arith.constant 0 : i32
    %c0_i32_0 = arith.constant 0 : i32
    %c0_i32_1 = arith.constant 0 : i32
    return %c0_i32, %c0_i32_0 : i32, i32
  }
  func.func @transform_6(%arg0: i32, %arg1: i32) -> (i32, i32, i32) {
    %c0_i32 = arith.constant 0 : i32
    %c0_i32_0 = arith.constant 0 : i32
    %c0_i32_1 = arith.constant 0 : i32
    return %arg0, %c0_i32, %c0_i32_0 : i32, i32, i32
  }
  func.func @transform_7(%arg0: i32, %arg1: i32) -> (i32, i32, i32) {
    %c0_i32 = arith.constant 0 : i32
    %c0_i32_0 = arith.constant 0 : i32
    return %arg0, %c0_i32, %arg1 : i32, i32, i32
  }
  func.func @transform_8(%arg0: i32, %arg1: i32) -> (i32, i32, i32) {
    %c0_i32 = arith.constant 0 : i32
    %c0_i32_0 = arith.constant 0 : i32
    %c0_i32_1 = arith.constant 0 : i32
    return %arg0, %c0_i32, %c0_i32_0 : i32, i32, i32
  }
}

</mosaic_0001>

<llo_original>
// kernel: tpu_custom_call.1
$region0: #{tpu_custom_call.1}
  #allocation0 [shape = 'u32[]', space=smem, size = 0x4, offset = 0x4, fixed_abs, tag = 'smem constant byte address 0x4 - core index']
  #allocation1 [shape = 'u32[144,128]{1,0:T(1,128)}', space=vmem, size = 0x12000, scoped, tag = 'internal scratch']
  #allocation2 [shape = 'f32[2,8,1]{2,1,0:T(8,128)}', space=vmem, size = 0x2000, scoped, tag = 'scratch operand']
  #allocation3 [shape = 'f32[2,8,1]{2,1,0:T(8,128)}', space=vmem, size = 0x2000, scoped, tag = 'scratch operand']
  #allocation4 [shape = 'f32[2,8,128]{2,1,0:T(8,128)}', space=vmem, size = 0x2000, scoped, tag = 'scratch operand']
  %s0 = inlined_call_operand.hbm [shape: f32[4,8,128], index: 0, kind: input, shape index: {}]
  %s1 = inlined_call_operand.hbm [shape: f32[4,128,128], index: 1, kind: input, shape index: {}]
  %s2 = inlined_call_operand.hbm [shape: f32[4,1,128], index: 2, kind: input, shape index: {}]
  %s3 = inlined_call_operand.hbm [shape: bf16[128,128], index: 3, kind: input, shape index: {}]
  %s4 = inlined_call_operand.hbm [shape: bf16[128,128], index: 4, kind: input, shape index: {}]
  %s5 = inlined_call_operand.vmem [shape: f32[1,128], index: 5, kind: input, shape index: {}]
  %s6 = inlined_call_operand.hbm [shape: f32[4,8,128], index: 6, kind: output, shape index: {0}]
  %s7 = inlined_call_operand.hbm [shape: f32[4,8,128], index: 7, kind: output, shape index: {1}]
  %s8 = inlined_call_operand.vmem [shape: f32[4,8,1], index: 8, kind: output, shape index: {2}]
  %9 = xla_tuple %s6, %s7, %s8
  %s10 = sld [smem:[#allocation0]]
  $region101: #{tpu_custom_call.1} parent=0
    _
  %s12 = ssub.s32 1, %s10
  %s13 = scalar_select 0, %s12, %s10
  $region1: #{tpu_custom_call.1} parent=0
    #allocation5 [shape = 'u8[16384]{0}', space=vmem, size = 0x4000, scoped, tag = 'input window, operand 0']
    #allocation6 [shape = 's32[2]{0}', space=sflag, size = 0x8, scoped, tag = 'scoped memory for tpu_custom_call.1']
    #allocation7 [shape = 's32[2]{0}', space=sflag, size = 0x8, scoped, tag = 'scoped memory for tpu_custom_call.1']
    #allocation8 [shape = 'u8[262144]{0}', space=vmem, size = 0x40000, scoped, tag = 'input window, operand 1']
    #allocation9 [shape = 's32[2]{0}', space=sflag, size = 0x8, scoped, tag = 'scoped memory for tpu_custom_call.1']
    #allocation10 [shape = 'u8[2048]{0}', space=vmem, size = 0x800, scoped, tag = 'input window, operand 2']
    #allocation11 [shape = 'u8[32768]{0}', space=vmem, size = 0x8000, scoped, tag = 'input window, operand 3, single buffered']
    #allocation12 [shape = 's32[1]{0}', space=sflag, size = 0x4, scoped, tag = 'scoped memory for tpu_custom_call.1']
    #allocation13 [shape = 'u8[32768]{0}', space=vmem, size = 0x8000, scoped, tag = 'input window, operand 4, single buffered']
    #allocation14 [shape = 'u8[16384]{0}', space=vmem, size = 0x4000, scoped, tag = 'output window, operand 0']
    #allocation15 [shape = 'u8[16384]{0}', space=vmem, size = 0x4000, scoped, tag = 'output window, operand 1']
    #allocation16 [shape = 's32[2]{0}', space=sflag, size = 0x8, scoped, tag = 'scoped memory for tpu_custom_call.1']
    %14 = vsyncpa [#allocation6], 0
    %s15 = scalar_lea.sflag [#allocation6], 1
    %16 = vsyncpa %s15, 0
    %17 = vsyncpa [#allocation9], 0
    %s18 = scalar_lea.sflag [#allocation9], 1
    %19 = vsyncpa %s18, 0
    %20 = vsyncpa [#allocation12], 0
    %21 = vsyncpa [#allocation7], 0
    %s22 = scalar_lea.sflag [#allocation7], 1
    %23 = vsyncpa %s22, 0
    %24 = vsyncpa [#allocation16], 0
    %s25 = scalar_lea.sflag [#allocation16], 1
    %26 = vsyncpa %s25, 0
    loop: start=0, step=1, limit=4
    $region2: #{tpu_custom_call.1} parent=1 // loop_pre_header
      _
    $region3: #{tpu_custom_call.1} parent=1 // loop_header
      %s28 = sphi 0, %s32
      %p29 = scmp.ge.s32.totalorder %s28, 4
      %s35 = sphi 0, %s47
      %s36 = sphi 0, %s43
      %s37 = sphi 0, %s35
      %s38 = sphi 0, %s36
      %s39 = sphi 0, %s37
      %s40 = sphi 0, %s38
      %s50 = sphi 0, %s52
      %s53 = sphi 0, %s50
      %s54 = sphi 0, %s53
      %s70 = sphi 0, %s54
      %s78 = sphi 0, %s80
      %s81 = sphi 0, %s78
      %s82 = sphi 0, %s81
      %s98 = sphi 0, %s82
      %s106 = sphi 0, %s108
      %s109 = sphi 0, %s106
      %s110 = sphi 0, %s109
      %s126 = sphi 0, %s110
      %s130 = sphi 0, %s130
      %s132 = sphi 0, %s130
      %s133 = sphi 0, %s132
      %s147 = sphi 0, %s133
      %s151 = sphi 0, %s151
      %s153 = sphi 0, %s151
      %s154 = sphi 0, %s153
      %s168 = sphi 0, %s154
      %s172 = sphi 0, %s172
      %s174 = sphi 0, %s172
      %s175 = sphi 0, %s174
      %s189 = sphi 0, %s175
      %s195 = sphi 0, %s197
      %s198 = sphi 0, %s195
      %s199 = sphi 0, %s198
      %s215 = sphi 0, %s199
      %s223 = sphi 0, %s225
      %s226 = sphi 0, %s223
      %s227 = sphi 0, %s226
      %s243 = sphi 0, %s227
      %s249 = sphi 0, %s251
      %s252 = sphi 0, %s249
      %s253 = sphi 0, %s252
      %s269 = sphi 0, %s253
    $region4: #{tpu_custom_call.1} parent=1 // loop_header_branch
      %31 = sbr.rel (%p29) target = $region8
    $region5: #{tpu_custom_call.1} parent=1 // loop_body
      %s33 = ssub.s32 %s28, 1
      %s34 = ssub.s32 %s28, 2
      %s41 = sadd.s32 1, %s36
      %p42 = scmp.ge.s32.totalorder %s41, 1
      %s43 = scalar_select %p42, 0, %s41
      %s44 = sadd.s32 1, %s35
      %s45 = scalar_select %p42, %s44, %s35
      %p46 = scmp.ge.s32.totalorder %s45, 2
      %s47 = scalar_select %p46, 0, %s45
      %s48 = ssub.s32 %s35, %s47
      %p49 = scmp.eq.s32.totalorder %s48, 0
      %s51 = sadd.s32 %s50, 1
      %s52 = scalar_select %p49, %s50, %s51
      %p55 = pneg %p49
      %p56 = scmp.eq.s32.totalorder %s28, 1
      %p57 = por %p55, %p56
      %p58 = scmp.ne.s32.totalorder %s50, %s53
      %p59 = scmp.eq.s32.totalorder %s28, 0
      %p60 = por %p58, %p59
      %p61 = scmp.ne.s32.totalorder %s50, %s53
      %p62 = scmp.eq.s32.totalorder %s33, 1
      %p63 = por %p61, %p62
      %p64 = scmp.ne.s32.totalorder %s53, %s54
      %p65 = scmp.eq.s32.totalorder %s33, 0
      %p66 = por %p64, %p65
      %p67 = scmp.ne.s32.totalorder %s53, %s54
      %p68 = scmp.eq.s32.totalorder %s34, 1
      %p69 = por %p67, %p68
      %p71 = scmp.ne.s32.totalorder %s54, %s70
      %p72 = scmp.eq.s32.totalorder %s34, 0
      %p73 = por %p71, %p72
      %s74 = ssub.s32 %s35, %s47
      %s75 = ssub.s32 %s36, %s43
      %s76 = sor.u32 %s74, %s75
      %p77 = scmp.eq.s32.totalorder %s76, 0
      %s79 = sadd.s32 %s78, 1
      %s80 = scalar_select %p77, %s78, %s79
      %p83 = pneg %p77
      %p84 = scmp.eq.s32.totalorder %s28, 1
      %p85 = por %p83, %p84
      %p86 = scmp.ne.s32.totalorder %s78, %s81
      %p87 = scmp.eq.s32.totalorder %s28, 0
      %p88 = por %p86, %p87
      %p89 = scmp.ne.s32.totalorder %s78, %s81
      %p90 = scmp.eq.s32.totalorder %s33, 1
      %p91 = por %p89, %p90
      %p92 = scmp.ne.s32.totalorder %s81, %s82
      %p93 = scmp.eq.s32.totalorder %s33, 0
      %p94 = por %p92, %p93
      %p95 = scmp.ne.s32.totalorder %s81, %s82
      %p96 = scmp.eq.s32.totalorder %s34, 1
      %p97 = por %p95, %p96
      %p99 = scmp.ne.s32.totalorder %s82, %s98
      %p100 = scmp.eq.s32.totalorder %s34, 0
      %p101 = por %p99, %p100
      %s102 = ssub.s32 %s35, %s47
      %s103 = ssub.s32 %s36, %s43
      %s104 = sor.u32 %s102, %s103
      %p105 = scmp.eq.s32.totalorder %s104, 0
      %s107 = sadd.s32 %s106, 1
      %s108 = scalar_select %p105, %s106, %s107
      %p111 = pneg %p105
      %p112 = scmp.eq.s32.totalorder %s28, 1
      %p113 = por %p111, %p112
      %p114 = scmp.ne.s32.totalorder %s106, %s109
      %p115 = scmp.eq.s32.totalorder %s28, 0
      %p116 = por %p114, %p115
      %p117 = scmp.ne.s32.totalorder %s106, %s109
      %p118 = scmp.eq.s32.totalorder %s33, 1
      %p119 = por %p117, %p118
      %p120 = scmp.ne.s32.totalorder %s109, %s110
      %p121 = scmp.eq.s32.totalorder %s33, 0
      %p122 = por %p120, %p121
      %p123 = scmp.ne.s32.totalorder %s109, %s110
      %p124 = scmp.eq.s32.totalorder %s34, 1
      %p125 = por %p123, %p124
      %p127 = scmp.ne.s32.totalorder %s110, %s126
      %p128 = scmp.eq.s32.totalorder %s34, 0
      %p129 = por %p127, %p128
      %s131 = sadd.s32 %s130, 1
      %p134 = scmp.eq.s32.totalorder %s28, 1
      %p135 = scmp.ne.s32.totalorder %s130, %s132
      %p136 = scmp.eq.s32.totalorder %s28, 0
      %p137 = por %p135, %p136
      %p138 = scmp.ne.s32.totalorder %s130, %s132
      %p139 = scmp.eq.s32.totalorder %s33, 1
      %p140 = por %p138, %p139
      %p141 = scmp.ne.s32.totalorder %s132, %s133
      %p142 = scmp.eq.s32.totalorder %s33, 0
      %p143 = por %p141, %p142
      %p144 = scmp.ne.s32.totalorder %s132, %s133
      %p145 = scmp.eq.s32.totalorder %s34, 1
      %p146 = por %p144, %p145
      %p148 = scmp.ne.s32.totalorder %s133, %s147
      %p149 = scmp.eq.s32.totalorder %s34, 0
      %p150 = por %p148, %p149
      %s152 = sadd.s32 %s151, 1
      %p155 = scmp.eq.s32.totalorder %s28, 1
      %p156 = scmp.ne.s32.totalorder %s151, %s153
      %p157 = scmp.eq.s32.totalorder %s28, 0
      %p158 = por %p156, %p157
      %p159 = scmp.ne.s32.totalorder %s151, %s153
      %p160 = scmp.eq.s32.totalorder %s33, 1
      %p161 = por %p159, %p160
      %p162 = scmp.ne.s32.totalorder %s153, %s154
      %p163 = scmp.eq.s32.totalorder %s33, 0
      %p164 = por %p162, %p163
      %p165 = scmp.ne.s32.totalorder %s153, %s154
      %p166 = scmp.eq.s32.totalorder %s34, 1
      %p167 = por %p165, %p166
      %p169 = scmp.ne.s32.totalorder %s154, %s168
      %p170 = scmp.eq.s32.totalorder %s34, 0
      %p171 = por %p169, %p170
      %s173 = sadd.s32 %s172, 1
      %p176 = scmp.eq.s32.totalorder %s28, 1
      %p177 = scmp.ne.s32.totalorder %s172, %s174
      %p178 = scmp.eq.s32.totalorder %s28, 0
      %p179 = por %p177, %p178
      %p180 = scmp.ne.s32.totalorder %s172, %s174
      %p181 = scmp.eq.s32.totalorder %s33, 1
      %p182 = por %p180, %p181
      %p183 = scmp.ne.s32.totalorder %s174, %s175
      %p184 = scmp.eq.s32.totalorder %s33, 0
      %p185 = por %p183, %p184
      %p186 = scmp.ne.s32.totalorder %s174, %s175
      %p187 = scmp.eq.s32.totalorder %s34, 1
      %p188 = por %p186, %p187
      %p190 = scmp.ne.s32.totalorder %s175, %s189
      %p191 = scmp.eq.s32.totalorder %s34, 0
      %p192 = por %p190, %p191
      %s193 = ssub.s32 %s35, %s47
      %p194 = scmp.eq.s32.totalorder %s193, 0
      %s196 = sadd.s32 %s195, 1
      %s197 = scalar_select %p194, %s195, %s196
      %p200 = pneg %p194
      %p201 = scmp.eq.s32.totalorder %s28, 1
      %p202 = por %p200, %p201
      %p203 = scmp.ne.s32.totalorder %s195, %s198
      %p204 = scmp.eq.s32.totalorder %s28, 0
      %p205 = por %p203, %p204
      %p206 = scmp.ne.s32.totalorder %s195, %s198
      %p207 = scmp.eq.s32.totalorder %s33, 1
      %p208 = por %p206, %p207
      %p209 = scmp.ne.s32.totalorder %s198, %s199
      %p210 = scmp.eq.s32.totalorder %s33, 0
      %p211 = por %p209, %p210
      %p212 = scmp.ne.s32.totalorder %s198, %s199
      %p213 = scmp.eq.s32.totalorder %s34, 1
      %p214 = por %p212, %p213
      %p216 = scmp.ne.s32.totalorder %s199, %s215
      %p217 = scmp.eq.s32.totalorder %s34, 0
      %p218 = por %p216, %p217
      %s219 = ssub.s32 %s35, %s47
      %s220 = ssub.s32 %s36, %s43
      %s221 = sor.u32 %s219, %s220
      %p222 = scmp.eq.s32.totalorder %s221, 0
      %s224 = sadd.s32 %s223, 1
      %s225 = scalar_select %p222, %s223, %s224
      %p228 = pneg %p222
      %p229 = scmp.eq.s32.totalorder %s28, 1
      %p230 = por %p228, %p229
      %p231 = scmp.ne.s32.totalorder %s223, %s226
      %p232 = scmp.eq.s32.totalorder %s28, 0
      %p233 = por %p231, %p232
      %p234 = scmp.ne.s32.totalorder %s223, %s226
      %p235 = scmp.eq.s32.totalorder %s33, 1
      %p236 = por %p234, %p235
      %p237 = scmp.ne.s32.totalorder %s226, %s227
      %p238 = scmp.eq.s32.totalorder %s33, 0
      %p239 = por %p237, %p238
      %p240 = scmp.ne.s32.totalorder %s226, %s227
      %p241 = scmp.eq.s32.totalorder %s34, 1
      %p242 = por %p240, %p241
      %p244 = scmp.ne.s32.totalorder %s227, %s243
      %p245 = scmp.eq.s32.totalorder %s34, 0
      %p246 = por %p244, %p245
      %s247 = ssub.s32 %s35, %s47
      %p248 = scmp.eq.s32.totalorder %s247, 0
      %s250 = sadd.s32 %s249, 1
      %s251 = scalar_select %p248, %s249, %s250
      %p254 = pneg %p248
      %p255 = scmp.eq.s32.totalorder %s28, 1
      %p256 = por %p254, %p255
      %p257 = scmp.ne.s32.totalorder %s249, %s252
      %p258 = scmp.eq.s32.totalorder %s28, 0
      %p259 = por %p257, %p258
      %p260 = scmp.ne.s32.totalorder %s249, %s252
      %p261 = scmp.eq.s32.totalorder %s33, 1
      %p262 = por %p260, %p261
      %p263 = scmp.ne.s32.totalorder %s252, %s253
      %p264 = scmp.eq.s32.totalorder %s33, 0
      %p265 = por %p263, %p264
      %p266 = scmp.ne.s32.totalorder %s252, %s253
      %p267 = scmp.eq.s32.totalorder %s34, 1
      %p268 = por %p266, %p267
      %p270 = scmp.ne.s32.totalorder %s253, %s269
      %p271 = scmp.eq.s32.totalorder %s34, 0
      %p272 = por %p270, %p271
      %p273 = scmp.le.s32.totalorder 1, %s28
      %p274 = scmp.lt.s32.totalorder %s28, 3
      %p275 = pnand %p273, %p274
      %p276 = pneg %p275
      // Predicated region
      $region9: #{tpu_custom_call.1} parent=5 // pred_check
        _
      $region10: #{tpu_custom_call.1} parent=5 // pred_check_branch
        %278 = sbr.rel (%p275) target = $region12
      $region11: #{tpu_custom_call.1} parent=5 // pred_region
        %s279 = ssub.s32 %s28, 1
        // Predicated region
        $region13: #{tpu_custom_call.1} parent=11 // pred_check
          %p280 = pneg %p143
        $region14: #{tpu_custom_call.1} parent=11 // pred_check_branch
          %282 = sbr.rel (%p280) target = $region16
        $region15: #{tpu_custom_call.1} parent=11 // pred_region
          %s284 = ssub.s32 1024, 1024
          %285 = vsyncadd [#allocation12], %s284
          %s286 = sshll.u32 [#allocation11], 4
          %s287 = int_to_ptr.vmem [resolvable:$true] %s286
          %292 = dma.hbm_to_vmem [thread:$0]  %s3, 1024, %s287, [#allocation12], 64, 64, 4
        $region16: #{tpu_custom_call.1} parent=11 // pred_fallthru
          _
        // Predicated region
        $region17: #{tpu_custom_call.1} parent=11 // pred_check
          %p293 = pneg %p164
        $region18: #{tpu_custom_call.1} parent=11 // pred_check_branch
          %295 = sbr.rel (%p293) target = $region20
        $region19: #{tpu_custom_call.1} parent=11 // pred_region
          %s297 = ssub.s32 1024, 1024
          %298 = vsyncadd [#allocation12], %s297
          %s299 = sshll.u32 [#allocation13], 4
          %s300 = int_to_ptr.vmem [resolvable:$true] %s299
          %305 = dma.hbm_to_vmem [thread:$0]  %s4, 1024, %s300, [#allocation12], 64, 64, 4
        $region20: #{tpu_custom_call.1} parent=11 // pred_fallthru
          _
        // Predicated region
        $region21: #{tpu_custom_call.1} parent=11 // pred_check
          %p306 = pneg %p185
        $region22: #{tpu_custom_call.1} parent=11 // pred_check_branch
          %308 = sbr.rel (%p306) target = $region24
        $region23: #{tpu_custom_call.1} parent=11 // pred_region
          _
        $region24: #{tpu_custom_call.1} parent=11 // pred_fallthru
          _
      $region12: #{tpu_custom_call.1} parent=5 // pred_fallthru
        _
      %p309 = scmp.lt.s32.totalorder %s28, 2
      // Predicated region
      $region25: #{tpu_custom_call.1} parent=5 // pred_check
        %p310 = pneg %p309
      $region26: #{tpu_custom_call.1} parent=5 // pred_check_branch
        %312 = sbr.rel (%p310) target = $region28
      $region27: #{tpu_custom_call.1} parent=5 // pred_region
        // Predicated region
        $region29: #{tpu_custom_call.1} parent=27 // pred_check
          %p313 = pneg %p60
        $region30: #{tpu_custom_call.1} parent=27 // pred_check_branch
          %315 = sbr.rel (%p313) target = $region32
        $region31: #{tpu_custom_call.1} parent=27 // pred_region
          %s316 = sand.u32 %s50, 1
          %s317 = scalar_lea.sflag [#allocation6], %s316
          %s318 = sand.u32 %s50, 1
          %s319 = smul.addr %s318, 16
          %s320 = scalar_lea.vmem [#allocation5], %s319
          %s321 = smul.u32 2, %s35
          %s323 = ssub.s32 256, 256
          %324 = vsyncadd %s317, %s323
          %s325 = smul.addr %s321, 128
          %s326 = scalar_lea.hbm %s0, %s325
          %s327 = sshll.u32 %s320, 4
          %s328 = int_to_ptr.vmem [resolvable:$true] %s327
          %333 = dma.hbm_to_vmem [thread:$0]  %s326, 256, %s328, %s317, 128, 128, 8
        $region32: #{tpu_custom_call.1} parent=27 // pred_fallthru
          _
        // Predicated region
        $region33: #{tpu_custom_call.1} parent=27 // pred_check
          %p334 = pneg %p88
        $region34: #{tpu_custom_call.1} parent=27 // pred_check_branch
          %336 = sbr.rel (%p334) target = $region36
        $region35: #{tpu_custom_call.1} parent=27 // pred_region
          %s337 = sand.u32 %s28, 1
          %s338 = scalar_lea.sflag [#allocation9], %s337
          %s339 = sand.u32 %s78, 1
          %s340 = smul.addr %s339, 256
          %s341 = scalar_lea.vmem [#allocation8], %s340
          %s342 = smul.u32 2, %s35
          %s343 = smul.u32 16, %s36
          %s345 = ssub.s32 4096, 4096
          %346 = vsyncadd %s338, %s345
          %s347 = smul.addr %s342, 16
          %s348 = sadd.s32 %s343, %s347
          %s349 = smul.addr %s348, 128
          %s350 = scalar_lea.hbm %s1, %s349
          %s351 = sshll.u32 %s341, 4
          %s352 = int_to_ptr.vmem [resolvable:$true] %s351
          %357 = dma.hbm_to_vmem [thread:$0]  %s350, 4096, %s352, %s338, 128, 128, 8
        $region36: #{tpu_custom_call.1} parent=27 // pred_fallthru
          _
        // Predicated region
        $region37: #{tpu_custom_call.1} parent=27 // pred_check
          %p358 = pneg %p116
        $region38: #{tpu_custom_call.1} parent=27 // pred_check_branch
          %360 = sbr.rel (%p358) target = $region40
        $region39: #{tpu_custom_call.1} parent=27 // pred_region
          %s361 = sand.u32 %s28, 1
          %s362 = scalar_lea.sflag [#allocation9], %s361
          %s363 = sand.u32 %s106, 1
          %s364 = smul.addr %s363, 2
          %s365 = scalar_lea.vmem [#allocation10], %s364
          %s366 = smul.u32 2, %s35
          %s368 = ssub.s32 32, 32
          %369 = vsyncadd %s362, %s368
          %s370 = sadd.s32 %s36, %s366
          %s371 = smul.addr %s370, 16
          %s372 = scalar_lea.hbm %s2, %s371
          %s373 = sshll.u32 %s365, 4
          %s374 = int_to_ptr.vmem [resolvable:$true] %s373
          %379 = dma.hbm_to_vmem [thread:$0]  %s372, 32, %s374, %s362, 16, 16, 1
        $region40: #{tpu_custom_call.1} parent=27 // pred_fallthru
          _
      $region28: #{tpu_custom_call.1} parent=5 // pred_fallthru
        _
      %p380 = scmp.le.s32.totalorder 1, %s28
      %p381 = scmp.lt.s32.totalorder %s28, 3
      %p382 = pnand %p380, %p381
      %p383 = pneg %p382
      // Predicated region
      $region41: #{tpu_custom_call.1} parent=5 // pred_check
        _
      $region42: #{tpu_custom_call.1} parent=5 // pred_check_branch
        %385 = sbr.rel (%p382) target = $region44
      $region43: #{tpu_custom_call.1} parent=5 // pred_region
        %s386 = ssub.s32 %s28, 1
        %s387 = sand.u32 %s53, 1
        %s388 = scalar_lea.sflag [#allocation6], %s387
        %s389 = sand.u32 %s53, 1
        %s390 = smul.addr %s389, 16
        %s391 = scalar_lea.vmem [#allocation5], %s390
        // Predicated region
        $region45: #{tpu_custom_call.1} parent=43 // pred_check
          %p392 = pneg %p66
        $region46: #{tpu_custom_call.1} parent=43 // pred_check_branch
          %394 = sbr.rel (%p392) target = $region48
        $region47: #{tpu_custom_call.1} parent=43 // pred_region
          %395 = dma.done %s388, 256
        $region48: #{tpu_custom_call.1} parent=43 // pred_fallthru
          _
        %s396 = sand.u32 %s33, 1
        %s397 = scalar_lea.sflag [#allocation9], %s396
        %s398 = sand.u32 %s81, 1
        %s399 = smul.addr %s398, 256
        %s400 = scalar_lea.vmem [#allocation8], %s399
        // Predicated region
        $region49: #{tpu_custom_call.1} parent=43 // pred_check
          %p401 = pneg %p94
        $region50: #{tpu_custom_call.1} parent=43 // pred_check_branch
          %403 = sbr.rel (%p401) target = $region52
        $region51: #{tpu_custom_call.1} parent=43 // pred_region
          %404 = dma.done %s397, 4096
        $region52: #{tpu_custom_call.1} parent=43 // pred_fallthru
          _
        %s405 = sand.u32 %s33, 1
        %s406 = scalar_lea.sflag [#allocation9], %s405
        %s407 = sand.u32 %s109, 1
        %s408 = smul.addr %s407, 2
        %s409 = scalar_lea.vmem [#allocation10], %s408
        // Predicated region
        $region53: #{tpu_custom_call.1} parent=43 // pred_check
          %p410 = pneg %p122
        $region54: #{tpu_custom_call.1} parent=43 // pred_check_branch
          %412 = sbr.rel (%p410) target = $region56
        $region55: #{tpu_custom_call.1} parent=43 // pred_region
          %413 = dma.done %s406, 32
        $region56: #{tpu_custom_call.1} parent=43 // pred_fallthru
          _
        // Predicated region
        $region57: #{tpu_custom_call.1} parent=43 // pred_check
          %p414 = pneg %p143
        $region58: #{tpu_custom_call.1} parent=43 // pred_check_branch
          %416 = sbr.rel (%p414) target = $region60
        $region59: #{tpu_custom_call.1} parent=43 // pred_region
          %417 = dma.done [#allocation12], 1024
        $region60: #{tpu_custom_call.1} parent=43 // pred_fallthru
          _
        // Predicated region
        $region61: #{tpu_custom_call.1} parent=43 // pred_check
          %p418 = pneg %p164
        $region62: #{tpu_custom_call.1} parent=43 // pred_check_branch
          %420 = sbr.rel (%p418) target = $region64
        $region63: #{tpu_custom_call.1} parent=43 // pred_region
          %421 = dma.done [#allocation12], 1024
        $region64: #{tpu_custom_call.1} parent=43 // pred_fallthru
          _
        %s422 = sand.u32 %s53, 1
        %s423 = scalar_lea.sflag [#allocation6], %s422
        %s424 = sand.u32 %s53, 1
        %s425 = smul.addr %s424, 16
        %s426 = scalar_lea.vmem [#allocation5], %s425
        %p427 = pneg %p66
        %p428 = pneg %p63
        %s429 = sand.u32 %s33, 1
        %s430 = scalar_lea.sflag [#allocation9], %s429
        %s431 = sand.u32 %s81, 1
        %s432 = smul.addr %s431, 256
        %s433 = scalar_lea.vmem [#allocation8], %s432
        %p434 = pneg %p94
        %p435 = pneg %p91
        %s436 = sand.u32 %s33, 1
        %s437 = scalar_lea.sflag [#allocation9], %s436
        %s438 = sand.u32 %s109, 1
        %s439 = smul.addr %s438, 2
        %s440 = scalar_lea.vmem [#allocation10], %s439
        %p441 = pneg %p122
        %p442 = pneg %p119
        %p443 = pneg %p143
        %p444 = pneg %p140
        %p445 = pneg %p164
        %p446 = pneg %p161
        %p447 = pneg %p185
        %p448 = pneg %p182
        %p449 = pneg %p211
        %p450 = pneg %p208
        %s451 = sand.u32 %s198, 1
        %s452 = scalar_lea.sflag [#allocation7], %s451
        %s453 = sand.u32 %s198, 1
        %s454 = smul.addr %s453, 16
        %s455 = scalar_lea.vmem [#allocation14], %s454
        %p456 = pneg %p239
        %p457 = pneg %p236
        %s458 = sand.u32 %s226, 1
        %s459 = scalar_lea.sflag [#allocation16], %s458
        %s460 = sand.u32 %s226, 1
        %s461 = smul.addr %s460, 16
        %s462 = scalar_lea.vmem [#allocation15], %s461
        %p463 = pneg %p265
        %p464 = pneg %p262
        %s465 = smul.u32 2, %s37
        %p466 = scmp.lt.s32.totalorder %s465, 3
        %s467 = scalar_select %p466, %s465, 3
        %s468 = smul.addr %s467, 8
        %s469 = scalar_lea.vmem %s8, %s468
        %s470 = smul.u32 2, %s37
        %s471 = smul.u32 2, %s37
        %s472 = smul.u32 16, %s38
        %s473 = smul.u32 2, %s37
        %s474 = smul.u32 2, %s37
        %s475 = smul.u32 2, %s37
        %s476 = smul.u32 2, %s37
        %p477 = scmp.lt.s32.totalorder %s476, 3
        %s478 = scalar_select %p477, %s476, 3
        %s479 = smul.addr %s478, 8
        %s480 = scalar_lea.vmem %s8, %s479
        %s481 = smul.u32 2, %s37
        %p483 = scmp.eq.s32.totalorder %s38, 0
        // Predicated region
        $region65: #{tpu_custom_call.1} parent=43 // pred_check
          %p484 = pneg %p483
        $region66: #{tpu_custom_call.1} parent=43 // pred_check_branch
          %486 = sbr.rel (%p484) target = $region68
        $region67: #{tpu_custom_call.1} parent=43 // pred_region
          %vm487 = vcmask 7168
          %488 = vst.msk [vmem:[#allocation2] sm:$0xff] %vm487, -inf
          %489 = vst.msk [vmem:[#allocation2 + $0x8] sm:$0xff] %vm487, -inf
          %490 = vst.msk [vmem:[#allocation3] sm:$0xff] %vm487, 0.0
          %491 = vst.msk [vmem:[#allocation3 + $0x8] sm:$0xff] %vm487, 0.0
          %492 = vst [vmem:[#allocation4] sm:$0xff] 0.0
          %493 = vst [vmem:[#allocation4 + $0x8] sm:$0xff] 0.0
        $region68: #{tpu_custom_call.1} parent=43 // pred_fallthru
          _
        %v494 = vld [vmem:[%s391] sm:$0xff]
        %v495 = vld [vmem:[%s391 + $0x8] sm:$0xff]
        %v496 = vpack.c.bf16 %v494, %v494
        %v497 = vpack.c.bf16 %v495, %v495
        %v498 = vld [vmem:[%s400] sm:$0xff]
        %v499 = vld [vmem:[%s400 + $0x8] sm:$0xff]
        %v500 = vld [vmem:[%s400 + $0x10] sm:$0xff]
        %v501 = vld [vmem:[%s400 + $0x18] sm:$0xff]
        %v502 = vld [vmem:[%s400 + $0x20] sm:$0xff]
        %v503 = vld [vmem:[%s400 + $0x28] sm:$0xff]
        %v504 = vld [vmem:[%s400 + $0x30] sm:$0xff]
        %v505 = vld [vmem:[%s400 + $0x38] sm:$0xff]
        %v506 = vld [vmem:[%s400 + $0x40] sm:$0xff]
        %v507 = vld [vmem:[%s400 + $0x48] sm:$0xff]
        %v508 = vld [vmem:[%s400 + $0x50] sm:$0xff]
        %v509 = vld [vmem:[%s400 + $0x58] sm:$0xff]
        %v510 = vld [vmem:[%s400 + $0x60] sm:$0xff]
        %v511 = vld [vmem:[%s400 + $0x68] sm:$0xff]
        %v512 = vld [vmem:[%s400 + $0x70] sm:$0xff]
        %v513 = vld [vmem:[%s400 + $0x78] sm:$0xff]
        %v514 = vld [vmem:[%s400 + $0x80] sm:$0xff]
        %v515 = vld [vmem:[%s400 + $0x88] sm:$0xff]
        %v516 = vld [vmem:[%s400 + $0x90] sm:$0xff]
        %v517 = vld [vmem:[%s400 + $0x98] sm:$0xff]
        %v518 = vld [vmem:[%s400 + $0xa0] sm:$0xff]
        %v519 = vld [vmem:[%s400 + $0xa8] sm:$0xff]
        %v520 = vld [vmem:[%s400 + $0xb0] sm:$0xff]
        %v521 = vld [vmem:[%s400 + $0xb8] sm:$0xff]
        %v522 = vld [vmem:[%s400 + $0xc0] sm:$0xff]
        %v523 = vld [vmem:[%s400 + $0xc8] sm:$0xff]
        %v524 = vld [vmem:[%s400 + $0xd0] sm:$0xff]
        %v525 = vld [vmem:[%s400 + $0xd8] sm:$0xff]
        %v526 = vld [vmem:[%s400 + $0xe0] sm:$0xff]
        %v527 = vld [vmem:[%s400 + $0xe8] sm:$0xff]
        %v528 = vld [vmem:[%s400 + $0xf0] sm:$0xff]
        %v529 = vld [vmem:[%s400 + $0xf8] sm:$0xff]
        %v530 = vpack.c.bf16 %v499, %v498
        %v531 = vpack.c.bf16 %v501, %v500
        %v532 = vpack.c.bf16 %v503, %v502
        %v533 = vpack.c.bf16 %v505, %v504
        %v534 = vpack.c.bf16 %v507, %v506
        %v535 = vpack.c.bf16 %v509, %v508
        %v536 = vpack.c.bf16 %v511, %v510
        %v537 = vpack.c.bf16 %v513, %v512
        %v538 = vpack.c.bf16 %v515, %v514
        %v539 = vpack.c.bf16 %v517, %v516
        %v540 = vpack.c.bf16 %v519, %v518
        %v541 = vpack.c.bf16 %v521, %v520
        %v542 = vpack.c.bf16 %v523, %v522
        %v543 = vpack.c.bf16 %v525, %v524
        %v544 = vpack.c.bf16 %v527, %v526
        %v545 = vpack.c.bf16 %v529, %v528
        %v546 = vld [vmem:[%s409] sm:$0x1]
        %v547 = vld [vmem:[%s409 + $0x1] sm:$0x1]
        %v550 = vlaneseq
        %v551 = vshrl.u32 %v550, 7
        %v552 = vsub.s32 0, %v551
        %v553 = vrot.slane %v546, %v552
        %v554 = vlaneseq
        %v555 = vshrl.u32 %v554, 7
        %v556 = vsub.s32 0, %v555
        %v557 = vrot.slane %v547, %v556
        %560 = vmatprep.subr.bf16.mxu0 0
        %561 = vmatpush1.bf16.xpose.msra.mxu0 %v537
        %562 = vmatprep.subr.bf16.mxu0 0
        %563 = vmatpush1.bf16.xpose.msra.mxu0 %v536
        %564 = vmatprep.subr.bf16.mxu0 0
        %565 = vmatpush1.bf16.xpose.msra.mxu0 %v535
        %566 = vmatprep.subr.bf16.mxu0 0
        %567 = vmatpush1.bf16.xpose.msra.mxu0 %v534
        %568 = vmatprep.subr.bf16.mxu0 0
        %569 = vmatpush1.bf16.xpose.msra.mxu0 %v533
        %570 = vmatprep.subr.bf16.mxu0 0
        %571 = vmatpush1.bf16.xpose.msra.mxu0 %v532
        %572 = vmatprep.subr.bf16.mxu0 0
        %573 = vmatpush1.bf16.xpose.msra.mxu0 %v531
        %574 = vmatprep.subr.bf16.mxu0 0
        %575 = vmatpush1.bf16.xpose.msra.mxu0 %v530
        %576 = vmatprep.subr.bf16.mxu0 0
        %577 = vmatpush2.bf16.xpose.msra.mxu0 0
        %578 = vmatprep.subr.bf16.mxu0 0
        %579 = vmatpush2.bf16.xpose.msra.mxu0 0
        %580 = vmatprep.subr.bf16.mxu0 0
        %581 = vmatpush2.bf16.xpose.msra.mxu0 0
        %582 = vmatprep.subr.bf16.mxu0 0
        %583 = vmatpush2.bf16.xpose.msra.mxu0 0
        %584 = vmatprep.subr.bf16.mxu0 0
        %585 = vmatpush2.bf16.xpose.msra.mxu0 0
        %586 = vmatprep.subr.bf16.mxu0 0
        %587 = vmatpush2.bf16.xpose.msra.mxu0 0
        %588 = vmatprep.subr.bf16.mxu0 0
        %589 = vmatpush2.bf16.xpose.msra.mxu0 0
        %590 = vmatprep.subr.bf16.mxu0 0
        %591 = vmatpush2.bf16.xpose.msra.mxu0 0
        %592 = vmatprep.mubr.bf16.mxu0 0
        %593 = vmatmul.mubr.bf16.gmra.mxu0 %v496
        %v594 = vpop.f32.mrf.mxu0
        %v595 = vadd.f32 %v553, %v594
        %v596 = vpop.f32.mrf.mxu0
        %v597 = vpop.f32.mrf.mxu0
        %v598 = vpop.f32.mrf.mxu0
        %599 = vdwg.mxu0
        %600 = vmatprep.subr.bf16.mxu0 0
        %601 = vmatpush1.bf16.xpose.msra.mxu0 %v545
        %602 = vmatprep.subr.bf16.mxu0 0
        %603 = vmatpush1.bf16.xpose.msra.mxu0 %v544
        %604 = vmatprep.subr.bf16.mxu0 0
        %605 = vmatpush1.bf16.xpose.msra.mxu0 %v543
        %606 = vmatprep.subr.bf16.mxu0 0
        %607 = vmatpush1.bf16.xpose.msra.mxu0 %v542
        %608 = vmatprep.subr.bf16.mxu0 0
        %609 = vmatpush1.bf16.xpose.msra.mxu0 %v541
        %610 = vmatprep.subr.bf16.mxu0 0
        %611 = vmatpush1.bf16.xpose.msra.mxu0 %v540
        %612 = vmatprep.subr.bf16.mxu0 0
        %613 = vmatpush1.bf16.xpose.msra.mxu0 %v539
        %614 = vmatprep.subr.bf16.mxu0 0
        %615 = vmatpush1.bf16.xpose.msra.mxu0 %v538
        %616 = vmatprep.subr.bf16.mxu0 0
        %617 = vmatpush2.bf16.xpose.msra.mxu0 0
        %618 = vmatprep.subr.bf16.mxu0 0
        %619 = vmatpush2.bf16.xpose.msra.mxu0 0
        %620 = vmatprep.subr.bf16.mxu0 0
        %621 = vmatpush2.bf16.xpose.msra.mxu0 0
        %622 = vmatprep.subr.bf16.mxu0 0
        %623 = vmatpush2.bf16.xpose.msra.mxu0 0
        %624 = vmatprep.subr.bf16.mxu0 0
        %625 = vmatpush2.bf16.xpose.msra.mxu0 0
        %626 = vmatprep.subr.bf16.mxu0 0
        %627 = vmatpush2.bf16.xpose.msra.mxu0 0
        %628 = vmatprep.subr.bf16.mxu0 0
        %629 = vmatpush2.bf16.xpose.msra.mxu0 0
        %630 = vmatprep.subr.bf16.mxu0 0
        %631 = vmatpush2.bf16.xpose.msra.mxu0 0
        %632 = vmatprep.mubr.bf16.mxu0 0
        %633 = vmatmul.mubr.bf16.gmra.mxu0 %v497
        %v634 = vpop.f32.mrf.mxu0
        %v635 = vadd.f32 %v557, %v634
        %v636 = vpop.f32.mrf.mxu0
        %v637 = vpop.f32.mrf.mxu0
        %v638 = vpop.f32.mrf.mxu0
        %639 = vdwg.mxu0
        %v640 = vld [vmem:[#allocation2] sm:$0xff]
        %v641 = vld [vmem:[#allocation2 + $0x8] sm:$0xff]
        %642 = vmax.xlane.f32.xlu0 %v595
        %v643 = vpop.xlane.xlu0 %642
        %644 = vmax.xlane.f32.xlu0 %v635
        %v645 = vpop.xlane.xlu0 %644
        %v646 = vmax.f32 %v640, %v643
        %v647 = vmax.f32 %v641, %v645
        %v648 = vsub.f32 %v640, %v646
        %v649 = vsub.f32 %v641, %v647
        %v650 = vmul.f32 %v648, 1.442695
        %v651 = vpow.pop %v650
        %v652 = vmul.f32 %v649, 1.442695
        %v653 = vpow.pop %v652
        %655 = vset.pattern.permute.xlu0 0
        %656 = vperm.xlu0 %655, %v646
        %v657 = vpop.permute.xlu0 %656
        %660 = vset.pattern.permute.xlu0 0
        %661 = vperm.xlu0 %660, %v647
        %v662 = vpop.permute.xlu0 %661
        %v664 = vsub.f32 %v595, %v657
        %v665 = vsub.f32 %v635, %v662
        %v666 = vmul.f32 %v664, 1.442695
        %v667 = vpow.pop %v666
        %v668 = vmul.f32 %v665, 1.442695
        %v669 = vpow.pop %v668
        %v670 = vld [vmem:[#allocation3] sm:$0xff]
        %v671 = vld [vmem:[#allocation3 + $0x8] sm:$0xff]
        %v672 = vmul.f32 %v651, %v670
        %v673 = vmul.f32 %v653, %v671
        %674 = vadd.xlane.f32.xlu0 %v667
        %v675 = vpop.xlane.xlu0 %674
        %676 = vadd.xlane.f32.xlu0 %v669
        %v677 = vpop.xlane.xlu0 %676
        %v678 = vadd.f32 %v672, %v675
        %v679 = vadd.f32 %v673, %v677
        %vm680 = vcmask 7168
        %681 = vst.msk [vmem:[#allocation3] sm:$0xff] %vm680, %v678
        %682 = vst.msk [vmem:[#allocation3 + $0x8] sm:$0xff] %vm680, %v679
        %v683 = vld [vmem:[#allocation4] sm:$0xff]
        %v684 = vld [vmem:[#allocation4 + $0x8] sm:$0xff]
        %686 = vset.pattern.permute.xlu0 0
        %687 = vperm.xlu0 %686, %v651
        %v688 = vpop.permute.xlu0 %687
        %691 = vset.pattern.permute.xlu0 0
        %692 = vperm.xlu0 %691, %v653
        %v693 = vpop.permute.xlu0 %692
        %v695 = vmul.f32 %v688, %v683
        %v696 = vmul.f32 %v693, %v684
        %v697 = vpack.c.bf16 %v667, %v667
        %v698 = vpack.c.bf16 %v669, %v669
        %699 = vmatprep.subr.bf16.mxu0 0
        %700 = vmatpush1.bf16.msra.mxu0 %v537
        %701 = vmatprep.subr.bf16.mxu0 0
        %702 = vmatpush1.bf16.msra.mxu0 %v536
        %703 = vmatprep.subr.bf16.mxu0 0
        %704 = vmatpush1.bf16.msra.mxu0 %v535
        %705 = vmatprep.subr.bf16.mxu0 0
        %706 = vmatpush1.bf16.msra.mxu0 %v534
        %707 = vmatprep.subr.bf16.mxu0 0
        %708 = vmatpush1.bf16.msra.mxu0 %v533
        %709 = vmatprep.subr.bf16.mxu0 0
        %710 = vmatpush1.bf16.msra.mxu0 %v532
        %711 = vmatprep.subr.bf16.mxu0 0
        %712 = vmatpush1.bf16.msra.mxu0 %v531
        %713 = vmatprep.subr.bf16.mxu0 0
        %714 = vmatpush1.bf16.msra.mxu0 %v530
        %715 = vmatprep.subr.bf16.mxu0 0
        %716 = vmatpush2.bf16.msra.mxu0 0
        %717 = vmatprep.subr.bf16.mxu0 0
        %718 = vmatpush2.bf16.msra.mxu0 0
        %719 = vmatprep.subr.bf16.mxu0 0
        %720 = vmatpush2.bf16.msra.mxu0 0
        %721 = vmatprep.subr.bf16.mxu0 0
        %722 = vmatpush2.bf16.msra.mxu0 0
        %723 = vmatprep.subr.bf16.mxu0 0
        %724 = vmatpush2.bf16.msra.mxu0 0
        %725 = vmatprep.subr.bf16.mxu0 0
        %726 = vmatpush2.bf16.msra.mxu0 0
        %727 = vmatprep.subr.bf16.mxu0 0
        %728 = vmatpush2.bf16.msra.mxu0 0
        %729 = vmatprep.subr.bf16.mxu0 0
        %730 = vmatpush2.bf16.msra.mxu0 0
        %731 = vmatprep.mubr.bf16.mxu0 0
        %732 = vmatmul.mubr.bf16.gmra.mxu0 %v697
        %v733 = vpop.f32.mrf.mxu0
        %v734 = vadd.f32 0.0, %v733
        %v735 = vpop.f32.mrf.mxu0
        %v736 = vpop.f32.mrf.mxu0
        %v737 = vpop.f32.mrf.mxu0
        %738 = vdwg.mxu0
        %739 = vmatprep.subr.bf16.mxu0 0
        %740 = vmatpush1.bf16.msra.mxu0 %v545
        %741 = vmatprep.subr.bf16.mxu0 0
        %742 = vmatpush1.bf16.msra.mxu0 %v544
        %743 = vmatprep.subr.bf16.mxu0 0
        %744 = vmatpush1.bf16.msra.mxu0 %v543
        %745 = vmatprep.subr.bf16.mxu0 0
        %746 = vmatpush1.bf16.msra.mxu0 %v542
        %747 = vmatprep.subr.bf16.mxu0 0
        %748 = vmatpush1.bf16.msra.mxu0 %v541
        %749 = vmatprep.subr.bf16.mxu0 0
        %750 = vmatpush1.bf16.msra.mxu0 %v540
        %751 = vmatprep.subr.bf16.mxu0 0
        %752 = vmatpush1.bf16.msra.mxu0 %v539
        %753 = vmatprep.subr.bf16.mxu0 0
        %754 = vmatpush1.bf16.msra.mxu0 %v538
        %755 = vmatprep.subr.bf16.mxu0 0
        %756 = vmatpush2.bf16.msra.mxu0 0
        %757 = vmatprep.subr.bf16.mxu0 0
        %758 = vmatpush2.bf16.msra.mxu0 0
        %759 = vmatprep.subr.bf16.mxu0 0
        %760 = vmatpush2.bf16.msra.mxu0 0
        %761 = vmatprep.subr.bf16.mxu0 0
        %762 = vmatpush2.bf16.msra.mxu0 0
        %763 = vmatprep.subr.bf16.mxu0 0
        %764 = vmatpush2.bf16.msra.mxu0 0
        %765 = vmatprep.subr.bf16.mxu0 0
        %766 = vmatpush2.bf16.msra.mxu0 0
        %767 = vmatprep.subr.bf16.mxu0 0
        %768 = vmatpush2.bf16.msra.mxu0 0
        %769 = vmatprep.subr.bf16.mxu0 0
        %770 = vmatpush2.bf16.msra.mxu0 0
        %771 = vmatprep.mubr.bf16.mxu0 0
        %772 = vmatmul.mubr.bf16.gmra.mxu0 %v698
        %v773 = vpop.f32.mrf.mxu0
        %v774 = vadd.f32 0.0, %v773
        %v775 = vpop.f32.mrf.mxu0
        %v776 = vpop.f32.mrf.mxu0
        %v777 = vpop.f32.mrf.mxu0
        %778 = vdwg.mxu0
        %v779 = vadd.f32 %v695, %v734
        %v780 = vadd.f32 %v696, %v774
        %781 = vst [vmem:[#allocation4] sm:$0xff] %v779
        %782 = vst [vmem:[#allocation4 + $0x8] sm:$0xff] %v780
        %783 = vst.msk [vmem:[#allocation2] sm:$0xff] %vm680, %v646
        %784 = vst.msk [vmem:[#allocation2 + $0x8] sm:$0xff] %vm680, %v647
        // Predicated region
        $region69: #{tpu_custom_call.1} parent=43 // pred_check
          %p785 = pneg %p483
        $region70: #{tpu_custom_call.1} parent=43 // pred_check_branch
          %787 = sbr.rel (%p785) target = $region72
        $region71: #{tpu_custom_call.1} parent=43 // pred_region
          %v788 = vld [vmem:[#allocation3] sm:$0xff]
          %v789 = vld [vmem:[#allocation3 + $0x8] sm:$0xff]
          %v790 = vrcp.pop %v788
          %v791 = vmul.f32 1.0, %v790
          %v792 = vrcp.pop %v789
          %v793 = vmul.f32 1.0, %v792
          %v794 = vld [vmem:[#allocation2] sm:$0xff]
          %v795 = vld [vmem:[#allocation2 + $0x8] sm:$0xff]
          %v796 = vlog2.pop %v788
          %v797 = vmul.f32 %v796, 0.6931472
          %v798 = vlog2.pop %v789
          %v799 = vmul.f32 %v798, 0.6931472
          %v800 = vadd.f32 %v794, %v797
          %v801 = vadd.f32 %v795, %v799
          %802 = vst.msk [vmem:[%s480] sm:$0xff] %vm680, %v800
          %803 = vst.msk [vmem:[%s480 + $0x8] sm:$0xff] %vm680, %v801
          %805 = vset.pattern.permute.xlu0 0
          %806 = vperm.xlu0 %805, %v791
          %v807 = vpop.permute.xlu0 %806
          %810 = vset.pattern.permute.xlu0 0
          %811 = vperm.xlu0 %810, %v793
          %v812 = vpop.permute.xlu0 %811
          %v814 = vmul.f32 %v667, %v807
          %v815 = vmul.f32 %v669, %v812
          %816 = vst [vmem:[%s462] sm:$0xff] %v814
          %817 = vst [vmem:[%s462 + $0x8] sm:$0xff] %v815
          %v818 = vld [vmem:[#allocation4] sm:$0xff]
          %v819 = vld [vmem:[#allocation4 + $0x8] sm:$0xff]
          %v820 = vmul.f32 %v818, %v807
          %v821 = vmul.f32 %v819, %v812
          %v822 = vld [vmem:[#allocation11] sm:$0xf]
          %v823 = vld [vmem:[#allocation11 + $0x4] sm:$0xf]
          %v824 = vld [vmem:[#allocation11 + $0x8] sm:$0xf]
          %v825 = vld [vmem:[#allocation11 + $0xc] sm:$0xf]
          %v826 = vld [vmem:[#allocation11 + $0x10] sm:$0xf]
          %v827 = vld [vmem:[#allocation11 + $0x14] sm:$0xf]
          %v828 = vld [vmem:[#allocation11 + $0x18] sm:$0xf]
          %v829 = vld [vmem:[#allocation11 + $0x1c] sm:$0xf]
          %v830 = vld [vmem:[#allocation11 + $0x20] sm:$0xf]
          %v831 = vld [vmem:[#allocation11 + $0x24] sm:$0xf]
          %v832 = vld [vmem:[#allocation11 + $0x28] sm:$0xf]
          %v833 = vld [vmem:[#allocation11 + $0x2c] sm:$0xf]
          %v834 = vld [vmem:[#allocation11 + $0x30] sm:$0xf]
          %v835 = vld [vmem:[#allocation11 + $0x34] sm:$0xf]
          %v836 = vld [vmem:[#allocation11 + $0x38] sm:$0xf]
          %v837 = vld [vmem:[#allocation11 + $0x3c] sm:$0xf]
          %v838 = vld [vmem:[#allocation13] sm:$0xf]
          %v839 = vld [vmem:[#allocation13 + $0x4] sm:$0xf]
          %v840 = vld [vmem:[#allocation13 + $0x8] sm:$0xf]
          %v841 = vld [vmem:[#allocation13 + $0xc] sm:$0xf]
          %v842 = vld [vmem:[#allocation13 + $0x10] sm:$0xf]
          %v843 = vld [vmem:[#allocation13 + $0x14] sm:$0xf]
          %v844 = vld [vmem:[#allocation13 + $0x18] sm:$0xf]
          %v845 = vld [vmem:[#allocation13 + $0x1c] sm:$0xf]
          %v846 = vld [vmem:[#allocation13 + $0x20] sm:$0xf]
          %v847 = vld [vmem:[#allocation13 + $0x24] sm:$0xf]
          %v848 = vld [vmem:[#allocation13 + $0x28] sm:$0xf]
          %v849 = vld [vmem:[#allocation13 + $0x2c] sm:$0xf]
          %v850 = vld [vmem:[#allocation13 + $0x30] sm:$0xf]
          %v851 = vld [vmem:[#allocation13 + $0x34] sm:$0xf]
          %v852 = vld [vmem:[#allocation13 + $0x38] sm:$0xf]
          %v853 = vld [vmem:[#allocation13 + $0x3c] sm:$0xf]
          %v854 = vld [vmem:[%s5] sm:$0x1]
          %v855 = vpack.c.bf16 %v821, %v820
          %v856 = vpack.c.bf16 %v495, %v494
          %v873 = vunpack.c.l.b16 %v838
          %v874 = vunpack.c.l.b16 %v839
          %v875 = vunpack.c.l.b16 %v840
          %v876 = vunpack.c.l.b16 %v841
          %v877 = vunpack.c.l.b16 %v842
          %v878 = vunpack.c.l.b16 %v843
          %v879 = vunpack.c.l.b16 %v844
          %v880 = vunpack.c.l.b16 %v845
          %v881 = vunpack.c.l.b16 %v846
          %v882 = vunpack.c.l.b16 %v847
          %v883 = vunpack.c.l.b16 %v848
          %v884 = vunpack.c.l.b16 %v849
          %v885 = vunpack.c.l.b16 %v850
          %v886 = vunpack.c.l.b16 %v851
          %v887 = vunpack.c.l.b16 %v852
          %v888 = vunpack.c.l.b16 %v853
          %v889 = vpack.c.b16 %v874, %v873
          %v890 = vpack.c.b16 %v876, %v875
          %v891 = vpack.c.b16 %v878, %v877
          %v892 = vpack.c.b16 %v880, %v879
          %v893 = vpack.c.b16 %v882, %v881
          %v894 = vpack.c.b16 %v884, %v883
          %v895 = vpack.c.b16 %v886, %v885
          %v896 = vpack.c.b16 %v888, %v887
          %905 = vmatprep.subr.bf16.mxu0 0
          %906 = vmatpush1.bf16.msra.mxu0 %v896
          %907 = vmatprep.subr.bf16.mxu0 0
          %908 = vmatpush1.bf16.msra.mxu0 %v895
          %909 = vmatprep.subr.bf16.mxu0 0
          %910 = vmatpush1.bf16.msra.mxu0 %v894
          %911 = vmatprep.subr.bf16.mxu0 0
          %912 = vmatpush1.bf16.msra.mxu0 %v893
          %913 = vmatprep.subr.bf16.mxu0 0
          %914 = vmatpush1.bf16.msra.mxu0 %v892
          %915 = vmatprep.subr.bf16.mxu0 0
          %916 = vmatpush1.bf16.msra.mxu0 %v891
          %917 = vmatprep.subr.bf16.mxu0 0
          %918 = vmatpush1.bf16.msra.mxu0 %v890
          %919 = vmatprep.subr.bf16.mxu0 0
          %920 = vmatpush1.bf16.msra.mxu0 %v889
          %921 = vmatprep.subr.bf16.mxu0 0
          %922 = vmatpush2.bf16.msra.mxu0 0
          %923 = vmatprep.subr.bf16.mxu0 0
          %924 = vmatpush2.bf16.msra.mxu0 0
          %925 = vmatprep.subr.bf16.mxu0 0
          %926 = vmatpush2.bf16.msra.mxu0 0
          %927 = vmatprep.subr.bf16.mxu0 0
          %928 = vmatpush2.bf16.msra.mxu0 0
          %929 = vmatprep.subr.bf16.mxu0 0
          %930 = vmatpush2.bf16.msra.mxu0 0
          %931 = vmatprep.subr.bf16.mxu0 0
          %932 = vmatpush2.bf16.msra.mxu0 0
          %933 = vmatprep.subr.bf16.mxu0 0
          %934 = vmatpush2.bf16.msra.mxu0 0
          %935 = vmatprep.subr.bf16.mxu0 0
          %936 = vmatpush2.bf16.msra.mxu0 0
          %937 = vmatprep.mubr.bf16.mxu0 0
          %938 = vmatmul.mubr.bf16.gmra.mxu0 %v856
          %v939 = vpop.f32.mrf.mxu0
          %v940 = vadd.f32 0.0, %v939
          %v941 = vpop.f32.mrf.mxu0
          %v942 = vpop.f32.mrf.mxu0
          %v943 = vadd.f32 0.0, %v942
          %v944 = vpop.f32.mrf.mxu0
          %945 = vdwg.mxu0
          %v962 = vunpack.c.l.b16 %v822
          %v963 = vunpack.c.l.b16 %v823
          %v964 = vunpack.c.l.b16 %v824
          %v965 = vunpack.c.l.b16 %v825
          %v966 = vunpack.c.l.b16 %v826
          %v967 = vunpack.c.l.b16 %v827
          %v968 = vunpack.c.l.b16 %v828
          %v969 = vunpack.c.l.b16 %v829
          %v970 = vunpack.c.l.b16 %v830
          %v971 = vunpack.c.l.b16 %v831
          %v972 = vunpack.c.l.b16 %v832
          %v973 = vunpack.c.l.b16 %v833
          %v974 = vunpack.c.l.b16 %v834
          %v975 = vunpack.c.l.b16 %v835
          %v976 = vunpack.c.l.b16 %v836
          %v977 = vunpack.c.l.b16 %v837
          %v978 = vpack.c.b16 %v963, %v962
          %v979 = vpack.c.b16 %v965, %v964
          %v980 = vpack.c.b16 %v967, %v966
          %v981 = vpack.c.b16 %v969, %v968
          %v982 = vpack.c.b16 %v971, %v970
          %v983 = vpack.c.b16 %v973, %v972
          %v984 = vpack.c.b16 %v975, %v974
          %v985 = vpack.c.b16 %v977, %v976
          %994 = vmatprep.subr.bf16.mxu0 0
          %995 = vmatpush1.bf16.msra.mxu0 %v985
          %996 = vmatprep.subr.bf16.mxu0 0
          %997 = vmatpush1.bf16.msra.mxu0 %v984
          %998 = vmatprep.subr.bf16.mxu0 0
          %999 = vmatpush1.bf16.msra.mxu0 %v983
          %1000 = vmatprep.subr.bf16.mxu0 0
          %1001 = vmatpush1.bf16.msra.mxu0 %v982
          %1002 = vmatprep.subr.bf16.mxu0 0
          %1003 = vmatpush1.bf16.msra.mxu0 %v981
          %1004 = vmatprep.subr.bf16.mxu0 0
          %1005 = vmatpush1.bf16.msra.mxu0 %v980
          %1006 = vmatprep.subr.bf16.mxu0 0
          %1007 = vmatpush1.bf16.msra.mxu0 %v979
          %1008 = vmatprep.subr.bf16.mxu0 0
          %1009 = vmatpush1.bf16.msra.mxu0 %v978
          %1010 = vmatprep.subr.bf16.mxu0 0
          %1011 = vmatpush2.bf16.msra.mxu0 0
          %1012 = vmatprep.subr.bf16.mxu0 0
          %1013 = vmatpush2.bf16.msra.mxu0 0
          %1014 = vmatprep.subr.bf16.mxu0 0
          %1015 = vmatpush2.bf16.msra.mxu0 0
          %1016 = vmatprep.subr.bf16.mxu0 0
          %1017 = vmatpush2.bf16.msra.mxu0 0
          %1018 = vmatprep.subr.bf16.mxu0 0
          %1019 = vmatpush2.bf16.msra.mxu0 0
          %1020 = vmatprep.subr.bf16.mxu0 0
          %1021 = vmatpush2.bf16.msra.mxu0 0
          %1022 = vmatprep.subr.bf16.mxu0 0
          %1023 = vmatpush2.bf16.msra.mxu0 0
          %1024 = vmatprep.subr.bf16.mxu0 0
          %1025 = vmatpush2.bf16.msra.mxu0 0
          %1026 = vmatprep.mubr.bf16.mxu0 0
          %1027 = vmatmul.mubr.bf16.gmra.mxu0 %v855
          %v1028 = vpop.f32.mrf.mxu0
          %v1029 = vadd.f32 %v940, %v1028
          %v1030 = vpop.f32.mrf.mxu0
          %v1031 = vpop.f32.mrf.mxu0
          %v1032 = vadd.f32 %v943, %v1031
          %v1033 = vpop.f32.mrf.mxu0
          %1034 = vdwg.mxu0
          %v1036 = vlaneseq
          %v1037 = vshrl.u32 %v1036, 7
          %v1038 = vsub.s32 0, %v1037
          %v1039 = vrot.slane %v854, %v1038
          %v1041 = vadd.f32 %v1029, %v1039
          %v1042 = vadd.f32 %v1032, %v1039
          %v1043 = vtanh.pop %v1041
          %v1044 = vtanh.pop %v1042
          %1045 = vst [vmem:[%s455] sm:$0xff] %v1043
          %1046 = vst [vmem:[%s455 + $0x8] sm:$0xff] %v1044
        $region72: #{tpu_custom_call.1} parent=43 // pred_fallthru
          _
        %s1047 = sand.u32 %s198, 1
        %s1048 = scalar_lea.sflag [#allocation7], %s1047
        %s1049 = sand.u32 %s198, 1
        %s1050 = smul.addr %s1049, 16
        %s1051 = scalar_lea.vmem [#allocation14], %s1050
        %s1052 = sand.u32 %s226, 1
        %s1053 = scalar_lea.sflag [#allocation16], %s1052
        %s1054 = sand.u32 %s226, 1
        %s1055 = smul.addr %s1054, 16
        %s1056 = scalar_lea.vmem [#allocation15], %s1055
        %s1057 = smul.u32 2, %s37
        %p1058 = scmp.lt.s32.totalorder %s1057, 3
        %s1059 = scalar_select %p1058, %s1057, 3
        %s1060 = smul.addr %s1059, 8
        %s1061 = scalar_lea.vmem %s8, %s1060
        // Predicated region
        $region73: #{tpu_custom_call.1} parent=43 // pred_check
          %p1062 = pneg %p208
        $region74: #{tpu_custom_call.1} parent=43 // pred_check_branch
          %1064 = sbr.rel (%p1062) target = $region76
        $region75: #{tpu_custom_call.1} parent=43 // pred_region
          %s1065 = smul.u32 2, %s37
          %s1067 = ssub.s32 256, 256
          %1068 = vsyncadd %s1048, %s1067
          %s1069 = smul.addr %s1065, 128
          %s1070 = scalar_lea.hbm %s6, %s1069
          %s1071 = sshll.u32 %s1051, 4
          %s1072 = int_to_ptr.vmem [resolvable:$true] %s1071
          %1077 = dma.vmem_to_hbm [thread:$0]  %s1072, 256, %s1070, %s1048, 128, 128, 8
        $region76: #{tpu_custom_call.1} parent=43 // pred_fallthru
          _
        // Predicated region
        $region77: #{tpu_custom_call.1} parent=43 // pred_check
          %p1078 = pneg %p236
        $region78: #{tpu_custom_call.1} parent=43 // pred_check_branch
          %1080 = sbr.rel (%p1078) target = $region80
        $region79: #{tpu_custom_call.1} parent=43 // pred_region
          %s1081 = smul.u32 2, %s37
          %s1083 = ssub.s32 256, 256
          %1084 = vsyncadd %s1053, %s1083
          %s1085 = sadd.s32 %s38, %s1081
          %s1086 = smul.addr %s1085, 128
          %s1087 = scalar_lea.hbm %s7, %s1086
          %s1088 = sshll.u32 %s1056, 4
          %s1089 = int_to_ptr.vmem [resolvable:$true] %s1088
          %1094 = dma.vmem_to_hbm [thread:$0]  %s1089, 256, %s1087, %s1053, 128, 128, 8
        $region80: #{tpu_custom_call.1} parent=43 // pred_fallthru
          _
        // Predicated region
        $region81: #{tpu_custom_call.1} parent=43 // pred_check
          %p1095 = pneg %p262
        $region82: #{tpu_custom_call.1} parent=43 // pred_check_branch
          %1097 = sbr.rel (%p1095) target = $region84
        $region83: #{tpu_custom_call.1} parent=43 // pred_region
          %s1098 = smul.u32 2, %s37
        $region84: #{tpu_custom_call.1} parent=43 // pred_fallthru
          _
      $region44: #{tpu_custom_call.1} parent=5 // pred_fallthru
        _
      %p1099 = scmp.le.s32.totalorder 2, %s28
      // Predicated region
      $region85: #{tpu_custom_call.1} parent=5 // pred_check
        %p1100 = pneg %p1099
      $region86: #{tpu_custom_call.1} parent=5 // pred_check_branch
        %1102 = sbr.rel (%p1100) target = $region88
      $region87: #{tpu_custom_call.1} parent=5 // pred_region
        %s1103 = ssub.s32 %s28, 2
        // Predicated region
        $region89: #{tpu_custom_call.1} parent=87 // pred_check
          %p1104 = pneg %p214
        $region90: #{tpu_custom_call.1} parent=87 // pred_check_branch
          %1106 = sbr.rel (%p1104) target = $region92
        $region91: #{tpu_custom_call.1} parent=87 // pred_region
          %s1107 = sand.u32 %s199, 1
          %s1108 = scalar_lea.sflag [#allocation7], %s1107
          %s1109 = sand.u32 %s199, 1
          %s1110 = smul.addr %s1109, 16
          %s1111 = scalar_lea.vmem [#allocation14], %s1110
          %1112 = dma.done %s1108, 256
        $region92: #{tpu_custom_call.1} parent=87 // pred_fallthru
          _
        // Predicated region
        $region93: #{tpu_custom_call.1} parent=87 // pred_check
          %p1113 = pneg %p242
        $region94: #{tpu_custom_call.1} parent=87 // pred_check_branch
          %1115 = sbr.rel (%p1113) target = $region96
        $region95: #{tpu_custom_call.1} parent=87 // pred_region
          %s1116 = sand.u32 %s227, 1
          %s1117 = scalar_lea.sflag [#allocation16], %s1116
          %s1118 = sand.u32 %s227, 1
          %s1119 = smul.addr %s1118, 16
          %s1120 = scalar_lea.vmem [#allocation15], %s1119
          %1121 = dma.done %s1117, 256
        $region96: #{tpu_custom_call.1} parent=87 // pred_fallthru
          _
        // Predicated region
        $region97: #{tpu_custom_call.1} parent=87 // pred_check
          %p1122 = pneg %p268
        $region98: #{tpu_custom_call.1} parent=87 // pred_check_branch
          %1124 = sbr.rel (%p1122) target = $region100
        $region99: #{tpu_custom_call.1} parent=87 // pred_region
          %s1125 = smul.u32 2, %s39
          %p1126 = scmp.lt.s32.totalorder %s1125, 3
          %s1127 = scalar_select %p1126, %s1125, 3
          %s1128 = smul.addr %s1127, 8
          %s1129 = scalar_lea.vmem %s8, %s1128
        $region100: #{tpu_custom_call.1} parent=87 // pred_fallthru
          _
      $region88: #{tpu_custom_call.1} parent=5 // pred_fallthru
        _
    $region6: #{tpu_custom_call.1} parent=1 // loop_footer
      %s32 = sadd.s32 1, %s28
    $region7: #{tpu_custom_call.1} parent=1 // loop_footer_branch
      %27 = sbr.rel target = $region3
    $region8: #{tpu_custom_call.1} parent=1 // loop_exit
      _
    %1130 = vsyncpa [#allocation6], 1
    %s1131 = scalar_lea.sflag [#allocation6], 1
    %1132 = vsyncpa %s1131, 1
    %1133 = vsyncpa [#allocation9], 1
    %s1134 = scalar_lea.sflag [#allocation9], 1
    %1135 = vsyncpa %s1134, 1
    %1136 = vsyncpa [#allocation12], 1
    %1137 = vsyncpa [#allocation7], 1
    %s1138 = scalar_lea.sflag [#allocation7], 1
    %1139 = vsyncpa %s1138, 1
    %1140 = vsyncpa [#allocation16], 1
    %s1141 = scalar_lea.sflag [#allocation16], 1
    %1142 = vsyncpa %s1141, 1

</llo_original>
